<compile_context>
chip_gen: v6e
topology: v6e:2x2x1
jax: 0.10.0
libtpu: 0.0.40
codegen_flags: <defaults>
</compile_context>

<pallas_src>
import numpy as np
import jax
import jax.numpy as jnp
from jax.experimental import pallas as pl
from jax.experimental.pallas import tpu as pltpu

# ----------------------------- model configuration -----------------------------
B = 2                      # batch
LATENT = 8                 # latent_size
C_ENC = 16                 # encoded_channels = channels[-1]
FH, FW = 4, 4              # final_size
CH0 = 8                    # first decode conv out channels (= channels[-2])
OUT_CH = 1                 # out_channels
H0, W0 = 2 * FH, 2 * FW    # after layer-0 upsample (8, 8)
H1, W1 = 2 * H0, 2 * W0    # after layer-1 upsample (16, 16)
LINEAR_SIZE = C_ENC * FH * FW      # 256
EPS = 1e-5                 # InstanceNorm2d eps
NEG_SLOPE = 0.01           # LeakyReLU default negative_slope


# ----------------------------- fused Pallas kernel -----------------------------
def decoder_kernel(z_ref, lw_ref, lb_ref, k0_ref, b0_ref,
                   mavg_ref, mexp_ref, k1_ref, b1_ref, o_ref):
    # Linear + ReLU:  (B, LATENT) @ (LATENT, C_ENC*FH*FW)
    h = jnp.dot(z_ref[...], lw_ref[...], preferred_element_type=jnp.float32)
    h = jnp.maximum(h + lb_ref[...], 0.0)                              # (B, 256)

    # Layer 0: view + nearest-upsample + pad(1) + conv3x3, all folded into K0.
    y0 = jnp.dot(h, k0_ref[...], preferred_element_type=jnp.float32)   # (B, CH0*H0*W0)
    y0 = y0 + b0_ref[...]

    # InstanceNorm2d (affine=False, biased variance) per (batch row, channel block).
    mean = jnp.dot(y0, mavg_ref[...], preferred_element_type=jnp.float32)      # (B, CH0)
    mean_b = jnp.dot(mean, mexp_ref[...], preferred_element_type=jnp.float32)  # (B, CH0*H0*W0)
    cent = y0 - mean_b
    var = jnp.dot(cent * cent, mavg_ref[...], preferred_element_type=jnp.float32)
    var_b = jnp.dot(var, mexp_ref[...], preferred_element_type=jnp.float32)
    xn = cent * jax.lax.rsqrt(var_b + EPS)
    a0 = jnp.where(xn >= 0, xn, NEG_SLOPE * xn)                        # LeakyReLU(0.01)

    # Layer 1: nearest-upsample + pad(1) + conv3x3 folded into K1; then sigmoid.
    y1 = jnp.dot(a0, k1_ref[...], preferred_element_type=jnp.float32)  # (B, OUT_CH*H1*W1)
    y1 = y1 + b1_ref[...]
    o_ref[...] = jax.nn.sigmoid(y1)


# ----------------------------- host-side (numpy, once) folding -----------------------------
def _conv_fold_matrix(w_hwio, hin, win):
    """Fold [nearest x2 upsample -> zero-pad(1) -> 3x3 stride-1 conv] into a single
    matrix K of shape (Cin*hin*win, Cout*hout*wout), acting on inputs flattened as
    (channel-major, row-major spatial) — i.e. the NCHW flattening."""
    kh, kw, cin, cout = w_hwio.shape
    hout, wout = 2 * hin, 2 * win
    hp, wp = hout + 2, wout + 2

    # upsample + pad routing: source (hin*win) -> padded upsampled grid (hp*wp)
    U = np.zeros((hin * win, hp * wp), np.float32)
    for pi in range(hp):
        for pj in range(wp):
            if 1 <= pi <= hout and 1 <= pj <= wout:
                si, sj = (pi - 1) // 2, (pj - 1) // 2
                U[si * win + sj, pi * wp + pj] = 1.0

    # per-tap shift routing: padded grid -> output grid, composed with U
    M = np.zeros((kh * kw, hin * win, hout * wout), np.float32)
    for dy in range(kh):
        for dx in range(kw):
            T = np.zeros((hp * wp, hout * wout), np.float32)
            for oi in range(hout):
                for oj in range(wout):
                    T[(oi + dy) * wp + (oj + dx), oi * wout + oj] = 1.0
            M[dy * kw + dx] = U @ T

    Wt = w_hwio.reshape(kh * kw, cin, cout)                      # (taps, Cin, Cout)
    K = np.einsum('tnc,tso->nsco', Wt, M)                        # (Cin, S_in, Cout, S_out)
    return np.ascontiguousarray(K.reshape(cin * hin * win, cout * hout * wout), np.float32)


def prepare_folded(params):
    lw = np.asarray(params["lw"], np.float32)        # (LATENT, 256)
    lb = np.asarray(params["lb"], np.float32)        # (256,)
    w0 = np.asarray(params["w0"], np.float32)        # (3,3,C_ENC,CH0)  HWIO
    b0 = np.asarray(params["b0"], np.float32)        # (CH0,)
    w1 = np.asarray(params["w1"], np.float32)        # (3,3,CH0,OUT_CH) HWIO
    b1 = np.asarray(params["b1"], np.float32)        # (OUT_CH,)

    k0 = _conv_fold_matrix(w0, FH, FW)               # (256, 512)
    k1 = _conv_fold_matrix(w1, H0, W0)               # (512, 256)

    hw0 = H0 * W0
    mavg = np.kron(np.eye(CH0, dtype=np.float32),
                   np.full((hw0, 1), 1.0 / hw0, np.float32))     # (CH0*hw0, CH0)
    mexp = np.kron(np.eye(CH0, dtype=np.float32),
                   np.ones((1, hw0), np.float32))                # (CH0, CH0*hw0)

    folded = {
        "lw": lw, "lb": lb[None, :],
        "k0": k0, "b0": np.repeat(b0, hw0)[None, :],
        "mavg": mavg, "mexp": mexp,
        "k1": k1, "b1": np.repeat(b1, H1 * W1)[None, :],
    }
    return {k: jnp.asarray(v) for k, v in folded.items()}


# ----------------------------- wrapper -----------------------------
@jax.jit
def decoder_forward(z, folded):
    Bx = z.shape[0]
    out_flat = pl.pallas_call(
        decoder_kernel,
        out_shape=jax.ShapeDtypeStruct((Bx, OUT_CH * H1 * W1), jnp.float32),
        in_specs=[pl.BlockSpec(memory_space=pltpu.MemorySpace.VMEM)] * 9,
        out_specs=pl.BlockSpec(memory_space=pltpu.MemorySpace.VMEM),
        # Single invocation (no grid): latency-bound workload, whole working set in VMEM.
        # TODO(synk): on v7x one could split the batch over the 2 TensorCores via core_map;
        # kept single-core since the kernel is dispatch/DMA-latency bound, not compute bound.
    )(z, folded["lw"], folded["lb"], folded["k0"], folded["b0"],
      folded["mavg"], folded["mexp"], folded["k1"], folded["b1"])
    # columns are exactly the NCHW flattening -> layout-free reshape
    return out_flat.reshape(Bx, OUT_CH, H1, W1)


# ----------------------------- reference (pure JAX, un-folded params) -----------------------------
def _upsample2_nhwc(x):
    return jnp.repeat(jnp.repeat(x, 2, axis=1), 2, axis=2)


def ref_forward(z, params):
    Bx = z.shape[0]
    y = jnp.maximum(z @ params["lw"] + params["lb"], 0.0)
    x = y.reshape(Bx, C_ENC, FH, FW)
    x = jnp.transpose(x, (0, 2, 3, 1))
    dn = ("NHWC", "HWIO", "NHWC")
    # layer 0
    x = _upsample2_nhwc(x)
    x = jax.lax.conv_general_dilated(x, params["w0"], (1, 1), "SAME",
                                     dimension_numbers=dn) + params["b0"]
    mean = x.mean(axis=(1, 2), keepdims=True)
    var = ((x - mean) ** 2).mean(axis=(1, 2), keepdims=True)
    x = (x - mean) / jnp.sqrt(var + EPS)
    x = jnp.where(x >= 0, x, NEG_SLOPE * x)
    # layer 1
    x = _upsample2_nhwc(x)
    x = jax.lax.conv_general_dilated(x, params["w1"], (1, 1), "SAME",
                                     dimension_numbers=dn) + params["b1"]
    x = jax.nn.sigmoid(x)
    return jnp.transpose(x, (0, 3, 1, 2))


# ----------------------------- deterministic params -----------------------------
def init_params(key):
    k = jax.random.split(key, 6)
    return {
        "lw": 0.1 * jax.random.normal(k[0], (LATENT, LINEAR_SIZE), jnp.float32),
        "lb": 0.1 * jax.random.normal(k[1], (LINEAR_SIZE,), jnp.float32),
        "w0": 0.1 * jax.random.normal(k[2], (3, 3, C_ENC, CH0), jnp.float32),   # HWIO
        "b0": 0.1 * jax.random.normal(k[3], (CH0,), jnp.float32),
        "w1": 0.1 * jax.random.normal(k[4], (3, 3, CH0, OUT_CH), jnp.float32),  # HWIO
        "b1": 0.1 * jax.random.normal(k[5], (OUT_CH,), jnp.float32),
    }


if __name__ == "__main__":
    # Decoder(spatial_dims=2, in_shape=(4,16,16), out_channels=1, final_size=(4,4),
    #         latent_size=8, channels=(8,16), strides=(1,1), num_res_units=0)
    z = jax.random.normal(jax.random.PRNGKey(0), (B, LATENT), jnp.float32)
    params = init_params(jax.random.PRNGKey(42))
    folded = prepare_folded(params)

    out = decoder_forward(z, folded)
    out = jax.block_until_ready(out)
    assert out.shape == (B, OUT_CH, H1, W1), out.shape

    ref = ref_forward(z, params)
    np.testing.assert_allclose(np.asarray(out), np.asarray(ref), rtol=1e-4, atol=1e-4)

    print("KERNEL_OK")
</pallas_src>

<mosaic_0001>
module attributes {stable_mosaic.version = 11 : i64} {
  func.func @decoder_kernel(%arg0: memref<2x8xf32, #tpu.memory_space<vmem>>, %arg1: memref<8x256xf32, #tpu.memory_space<vmem>>, %arg2: memref<1x256xf32, #tpu.memory_space<vmem>>, %arg3: memref<256x512xf32, #tpu.memory_space<vmem>>, %arg4: memref<1x512xf32, #tpu.memory_space<vmem>>, %arg5: memref<512x8xf32, #tpu.memory_space<vmem>>, %arg6: memref<8x512xf32, #tpu.memory_space<vmem>>, %arg7: memref<512x256xf32, #tpu.memory_space<vmem>>, %arg8: memref<1x256xf32, #tpu.memory_space<vmem>>, %arg9: memref<2x256xf32, #tpu.memory_space<vmem>>) attributes {dimension_semantics = [], scalar_prefetch = 0 : i64, scratch_operands = 0 : i64, tpu.core_type = #tpu.core_type<tc>} {
    %c0 = arith.constant 0 : index
    %c0_0 = arith.constant 0 : index
    %0 = vector.load %arg0[%c0, %c0_0] : memref<2x8xf32, #tpu.memory_space<vmem>>, vector<2x8xf32>
    %c0_1 = arith.constant 0 : index
    %c0_2 = arith.constant 0 : index
    %1 = vector.load %arg1[%c0_1, %c0_2] : memref<8x256xf32, #tpu.memory_space<vmem>>, vector<8x256xf32>
    %cst = arith.constant dense<0.000000e+00> : vector<2x256xf32>
    %2 = tpu.matmul %0, %1, %cst {dimension_numbers = #tpu.dot_dimension_numbers<[1], [0], [0], [1], [0, 0, 1, 1], [], []>} : vector<2x8xf32>, vector<8x256xf32>, vector<2x256xf32> -> vector<2x256xf32>
    %c0_3 = arith.constant 0 : index
    %c0_4 = arith.constant 0 : index
    %3 = vector.load %arg2[%c0_3, %c0_4] : memref<1x256xf32, #tpu.memory_space<vmem>>, vector<1x256xf32>
    %4 = vector.broadcast %3 : vector<1x256xf32> to vector<2x256xf32>
    %5 = arith.addf %2, %4 : vector<2x256xf32>
    %cst_5 = arith.constant 0.000000e+00 : f32
    %6 = vector.broadcast %cst_5 : f32 to vector<2x256xf32>
    %7 = arith.maximumf %5, %6 : vector<2x256xf32>
    %c0_6 = arith.constant 0 : index
    %c0_7 = arith.constant 0 : index
    %8 = vector.load %arg3[%c0_6, %c0_7] : memref<256x512xf32, #tpu.memory_space<vmem>>, vector<256x512xf32>
    %cst_8 = arith.constant dense<0.000000e+00> : vector<2x512xf32>
    %9 = tpu.matmul %7, %8, %cst_8 {dimension_numbers = #tpu.dot_dimension_numbers<[1], [0], [0], [1], [0, 0, 1, 1], [], []>} : vector<2x256xf32>, vector<256x512xf32>, vector<2x512xf32> -> vector<2x512xf32>
    %c0_9 = arith.constant 0 : index
    %c0_10 = arith.constant 0 : index
    %10 = vector.load %arg4[%c0_9, %c0_10] : memref<1x512xf32, #tpu.memory_space<vmem>>, vector<1x512xf32>
    %11 = vector.broadcast %10 : vector<1x512xf32> to vector<2x512xf32>
    %12 = arith.addf %9, %11 : vector<2x512xf32>
    %c0_11 = arith.constant 0 : index
    %c0_12 = arith.constant 0 : index
    %13 = vector.load %arg5[%c0_11, %c0_12] : memref<512x8xf32, #tpu.memory_space<vmem>>, vector<512x8xf32>
    %cst_13 = arith.constant dense<0.000000e+00> : vector<2x8xf32>
    %14 = tpu.matmul %12, %13, %cst_13 {dimension_numbers = #tpu.dot_dimension_numbers<[1], [0], [0], [1], [0, 0, 1, 1], [], []>} : vector<2x512xf32>, vector<512x8xf32>, vector<2x8xf32> -> vector<2x8xf32>
    %c0_14 = arith.constant 0 : index
    %c0_15 = arith.constant 0 : index
    %15 = vector.load %arg6[%c0_14, %c0_15] : memref<8x512xf32, #tpu.memory_space<vmem>>, vector<8x512xf32>
    %cst_16 = arith.constant dense<0.000000e+00> : vector<2x512xf32>
    %16 = tpu.matmul %14, %15, %cst_16 {dimension_numbers = #tpu.dot_dimension_numbers<[1], [0], [0], [1], [0, 0, 1, 1], [], []>} : vector<2x8xf32>, vector<8x512xf32>, vector<2x512xf32> -> vector<2x512xf32>
    %17 = arith.subf %12, %16 : vector<2x512xf32>
    %18 = arith.mulf %17, %17 : vector<2x512xf32>
    %c0_17 = arith.constant 0 : index
    %c0_18 = arith.constant 0 : index
    %19 = vector.load %arg5[%c0_17, %c0_18] : memref<512x8xf32, #tpu.memory_space<vmem>>, vector<512x8xf32>
    %cst_19 = arith.constant dense<0.000000e+00> : vector<2x8xf32>
    %20 = tpu.matmul %18, %19, %cst_19 {dimension_numbers = #tpu.dot_dimension_numbers<[1], [0], [0], [1], [0, 0, 1, 1], [], []>} : vector<2x512xf32>, vector<512x8xf32>, vector<2x8xf32> -> vector<2x8xf32>
    %c0_20 = arith.constant 0 : index
    %c0_21 = arith.constant 0 : index
    %21 = vector.load %arg6[%c0_20, %c0_21] : memref<8x512xf32, #tpu.memory_space<vmem>>, vector<8x512xf32>
    %cst_22 = arith.constant dense<0.000000e+00> : vector<2x512xf32>
    %22 = tpu.matmul %20, %21, %cst_22 {dimension_numbers = #tpu.dot_dimension_numbers<[1], [0], [0], [1], [0, 0, 1, 1], [], []>} : vector<2x8xf32>, vector<8x512xf32>, vector<2x512xf32> -> vector<2x512xf32>
    %cst_23 = arith.constant 9.99999974E-6 : f32
    %23 = vector.broadcast %cst_23 : f32 to vector<2x512xf32>
    %24 = arith.addf %22, %23 : vector<2x512xf32>
    %25 = math.rsqrt %24 : vector<2x512xf32>
    %26 = arith.mulf %17, %25 : vector<2x512xf32>
    %cst_24 = arith.constant 0.000000e+00 : f32
    %27 = vector.broadcast %cst_24 : f32 to vector<2x512xf32>
    %28 = arith.cmpf oge, %26, %27 : vector<2x512xf32>
    %cst_25 = arith.constant 0.00999999977 : f32
    %29 = vector.broadcast %cst_25 : f32 to vector<2x512xf32>
    %30 = arith.mulf %29, %26 : vector<2x512xf32>
    %31 = arith.select %28, %26, %30 : vector<2x512xi1>, vector<2x512xf32>
    %c0_26 = arith.constant 0 : index
    %c0_27 = arith.constant 0 : index
    %32 = vector.load %arg7[%c0_26, %c0_27] : memref<512x256xf32, #tpu.memory_space<vmem>>, vector<512x256xf32>
    %cst_28 = arith.constant dense<0.000000e+00> : vector<2x256xf32>
    %33 = tpu.matmul %31, %32, %cst_28 {dimension_numbers = #tpu.dot_dimension_numbers<[1], [0], [0], [1], [0, 0, 1, 1], [], []>} : vector<2x512xf32>, vector<512x256xf32>, vector<2x256xf32> -> vector<2x256xf32>
    %c0_29 = arith.constant 0 : index
    %c0_30 = arith.constant 0 : index
    %34 = vector.load %arg8[%c0_29, %c0_30] : memref<1x256xf32, #tpu.memory_space<vmem>>, vector<1x256xf32>
    %35 = vector.broadcast %34 : vector<1x256xf32> to vector<2x256xf32>
    %36 = arith.addf %33, %35 : vector<2x256xf32>
    %37 = arith.negf %36 : vector<2x256xf32>
    %38 = math.exp %37 : vector<2x256xf32>
    %cst_31 = arith.constant 1.000000e+00 : f32
    %39 = vector.broadcast %cst_31 : f32 to vector<2x256xf32>
    %40 = arith.addf %39, %38 : vector<2x256xf32>
    %41 = arith.divf %39, %40 : vector<2x256xf32>
    %c0_32 = arith.constant 0 : index
    %c0_33 = arith.constant 0 : index
    %42 = vector.load %arg9[%c0_32, %c0_33] : memref<2x256xf32, #tpu.memory_space<vmem>>, vector<2x256xf32>
    tpu.vector_store %arg9[%c0_32, %c0_33], %41 {strides = array<i32>} : memref<2x256xf32, #tpu.memory_space<vmem>>, vector<2x256xf32>,
    return
  }
}

</mosaic_0001>

<llo_original>
// kernel: decoder_forward.1
$region0: #{decoder_forward.1}
  #allocation0 [shape = 'u32[]', space=smem, size = 0x4, offset = 0x4, fixed_abs, tag = 'smem constant byte address 0x4 - core index']
  #allocation1 [shape = 'u32[144,128]{1,0:T(1,128)}', space=vmem, size = 0x12000, scoped, tag = 'internal scratch']
  %s0 = inlined_call_operand.vmem [shape: f32[2,8], index: 0, kind: input, shape index: {}]
  %s1 = inlined_call_operand.vmem [shape: f32[8,256], index: 1, kind: input, shape index: {}]
  %s2 = inlined_call_operand.vmem [shape: f32[1,256], index: 2, kind: input, shape index: {}]
  %s3 = inlined_call_operand.hbm [shape: f32[256,512], index: 3, kind: input, shape index: {}]
  %s4 = inlined_call_operand.vmem [shape: f32[1,512], index: 4, kind: input, shape index: {}]
  %s5 = inlined_call_operand.vmem [shape: f32[512,8], index: 5, kind: input, shape index: {}]
  %s6 = inlined_call_operand.vmem [shape: f32[8,512], index: 6, kind: input, shape index: {}]
  %s7 = inlined_call_operand.hbm [shape: f32[512,256], index: 7, kind: input, shape index: {}]
  %s8 = inlined_call_operand.vmem [shape: f32[1,256], index: 8, kind: input, shape index: {}]
  %s9 = inlined_call_operand.vmem [shape: f32[2,256], index: 9, kind: output, shape index: {}]
  %s10 = sld [smem:[#allocation0]]
  $region54: #{decoder_forward.1} parent=0
    _
  %s12 = ssub.s32 1, %s10
  %s13 = scalar_select 0, %s12, %s10
  $region1: #{decoder_forward.1} parent=0
    #allocation2 [shape = 'u8[524288]{0}', space=vmem, size = 0x80000, scoped, tag = 'input window, operand 3, single buffered']
    #allocation3 [shape = 's32[1]{0}', space=sflag, size = 0x4, scoped, tag = 'scoped memory for decoder_forward.1']
    #allocation4 [shape = 'u8[524288]{0}', space=vmem, size = 0x80000, scoped, tag = 'input window, operand 7, single buffered']
    #allocation5 [shape = 's32[1]{0}', space=sflag, size = 0x4, scoped, tag = 'scoped memory for decoder_forward.1']
    %14 = vsyncpa [#allocation3], 0
    %15 = vsyncpa [#allocation5], 0
    // Predicated region
    $region2: #{decoder_forward.1} parent=1 // pred_check
      _
    $region3: #{decoder_forward.1} parent=1 // pred_check_branch
      %17 = sbr.rel (0) target = $region5
    $region4: #{decoder_forward.1} parent=1 // pred_region
      _
    $region5: #{decoder_forward.1} parent=1 // pred_fallthru
      _
    // Predicated region
    $region6: #{decoder_forward.1} parent=1 // pred_check
      _
    $region7: #{decoder_forward.1} parent=1 // pred_check_branch
      %19 = sbr.rel (0) target = $region9
    $region8: #{decoder_forward.1} parent=1 // pred_region
      _
    $region9: #{decoder_forward.1} parent=1 // pred_fallthru
      _
    // Predicated region
    $region10: #{decoder_forward.1} parent=1 // pred_check
      _
    $region11: #{decoder_forward.1} parent=1 // pred_check_branch
      %21 = sbr.rel (0) target = $region13
    $region12: #{decoder_forward.1} parent=1 // pred_region
      _
    $region13: #{decoder_forward.1} parent=1 // pred_fallthru
      _
    // Predicated region
    $region14: #{decoder_forward.1} parent=1 // pred_check
      _
    $region15: #{decoder_forward.1} parent=1 // pred_check_branch
      %23 = sbr.rel (0) target = $region17
    $region16: #{decoder_forward.1} parent=1 // pred_region
      %s25 = ssub.s32 16384, 16384
      %26 = vsyncadd [#allocation3], %s25
      %s27 = sshll.u32 [#allocation2], 4
      %s28 = int_to_ptr.vmem [resolvable:$true] %s27
      %33 = dma.hbm_to_vmem [thread:$0]  %s3, 16384, %s28, [#allocation3], 512, 512, 32
    $region17: #{decoder_forward.1} parent=1 // pred_fallthru
      _
    // Predicated region
    $region18: #{decoder_forward.1} parent=1 // pred_check
      _
    $region19: #{decoder_forward.1} parent=1 // pred_check_branch
      %35 = sbr.rel (0) target = $region21
    $region20: #{decoder_forward.1} parent=1 // pred_region
      _
    $region21: #{decoder_forward.1} parent=1 // pred_fallthru
      _
    // Predicated region
    $region22: #{decoder_forward.1} parent=1 // pred_check
      _
    $region23: #{decoder_forward.1} parent=1 // pred_check_branch
      %37 = sbr.rel (0) target = $region25
    $region24: #{decoder_forward.1} parent=1 // pred_region
      _
    $region25: #{decoder_forward.1} parent=1 // pred_fallthru
      _
    // Predicated region
    $region26: #{decoder_forward.1} parent=1 // pred_check
      _
    $region27: #{decoder_forward.1} parent=1 // pred_check_branch
      %39 = sbr.rel (0) target = $region29
    $region28: #{decoder_forward.1} parent=1 // pred_region
      _
    $region29: #{decoder_forward.1} parent=1 // pred_fallthru
      _
    // Predicated region
    $region30: #{decoder_forward.1} parent=1 // pred_check
      _
    $region31: #{decoder_forward.1} parent=1 // pred_check_branch
      %41 = sbr.rel (0) target = $region33
    $region32: #{decoder_forward.1} parent=1 // pred_region
      %s43 = ssub.s32 16384, 16384
      %44 = vsyncadd [#allocation5], %s43
      %s45 = sshll.u32 [#allocation4], 4
      %s46 = int_to_ptr.vmem [resolvable:$true] %s45
      %51 = dma.hbm_to_vmem [thread:$0]  %s7, 16384, %s46, [#allocation5], 256, 256, 16
    $region33: #{decoder_forward.1} parent=1 // pred_fallthru
      _
    // Predicated region
    $region34: #{decoder_forward.1} parent=1 // pred_check
      _
    $region35: #{decoder_forward.1} parent=1 // pred_check_branch
      %53 = sbr.rel (0) target = $region37
    $region36: #{decoder_forward.1} parent=1 // pred_region
      _
    $region37: #{decoder_forward.1} parent=1 // pred_fallthru
      _
    // Predicated region
    $region38: #{decoder_forward.1} parent=1 // pred_check
      _
    $region39: #{decoder_forward.1} parent=1 // pred_check_branch
      %55 = sbr.rel (0) target = $region41
    $region40: #{decoder_forward.1} parent=1 // pred_region
      %56 = dma.done [#allocation3], 16384
    $region41: #{decoder_forward.1} parent=1 // pred_fallthru
      _
    // Predicated region
    $region42: #{decoder_forward.1} parent=1 // pred_check
      _
    $region43: #{decoder_forward.1} parent=1 // pred_check_branch
      %58 = sbr.rel (0) target = $region45
    $region44: #{decoder_forward.1} parent=1 // pred_region
      %59 = dma.done [#allocation5], 16384
    $region45: #{decoder_forward.1} parent=1 // pred_fallthru
      _
    %v60 = vld [vmem:[%s0] sm:$0x3]
    %v61 = vld [vmem:[%s1] sm:$0xff]
    %v62 = vld [vmem:[%s1 + $0x8] sm:$0xff]
    %v63 = vld [vmem:[%s2] sm:$0x3]
    %v65 = vlaneseq
    %v66 = vshrl.u32 %v65, 7
    %v67 = vsub.s32 0, %v66
    %v68 = vrot.slane %v63, %v67
    %v69 = vlaneseq
    %v70 = vshrl.u32 %v69, 7
    %v71 = vsub.s32 1, %v70
    %v72 = vrot.slane %v63, %v71
    %vm75 = vcmask 64512
    %v77 = vsel %vm75, %v60, 0
    %79 = vmatprep.subr.mxu0 0.0
    %80 = vmatpush1.msra.mxu0 0.0
    %81 = vmatprep.subr.mxu0 0.0
    %82 = vmatpush1.msra.mxu0 0.0
    %83 = vmatprep.subr.mxu0 0.0
    %84 = vmatpush1.msra.mxu0 0.0
    %85 = vmatprep.subr.mxu0 0.0
    %86 = vmatpush1.msra.mxu0 0.0
    %87 = vmatprep.subr.mxu0 0.0
    %88 = vmatpush1.msra.mxu0 0.0
    %89 = vmatprep.subr.mxu0 0.0
    %90 = vmatpush1.msra.mxu0 0.0
    %91 = vmatprep.subr.mxu0 0.0
    %92 = vmatpush1.msra.mxu0 0.0
    %93 = vmatprep.subr.mxu0 0.0
    %94 = vmatpush1.msra.mxu0 0.0
    %95 = vmatprep.subr.mxu0 0.0
    %96 = vmatpush1.msra.mxu0 0.0
    %97 = vmatprep.subr.mxu0 0.0
    %98 = vmatpush1.msra.mxu0 0.0
    %99 = vmatprep.subr.mxu0 0.0
    %100 = vmatpush1.msra.mxu0 0.0
    %101 = vmatprep.subr.mxu0 0.0
    %102 = vmatpush1.msra.mxu0 0.0
    %103 = vmatprep.subr.mxu0 0.0
    %104 = vmatpush1.msra.mxu0 0.0
    %105 = vmatprep.subr.mxu0 0.0
    %106 = vmatpush1.msra.mxu0 0.0
    %107 = vmatprep.subr.mxu0 0.0
    %108 = vmatpush1.msra.mxu0 0.0
    %109 = vmatprep.subr.mxu0 %v62
    %110 = vmatpush1.msra.mxu0 %v61
    %111 = vmatprep.subr.mxu0 0.0
    %112 = vmatpush2.msra.mxu0 0.0
    %113 = vmatprep.subr.mxu0 0.0
    %114 = vmatpush2.msra.mxu0 0.0
    %115 = vmatprep.subr.mxu0 0.0
    %116 = vmatpush2.msra.mxu0 0.0
    %117 = vmatprep.subr.mxu0 0.0
    %118 = vmatpush2.msra.mxu0 0.0
    %119 = vmatprep.subr.mxu0 0.0
    %120 = vmatpush2.msra.mxu0 0.0
    %121 = vmatprep.subr.mxu0 0.0
    %122 = vmatpush2.msra.mxu0 0.0
    %123 = vmatprep.subr.mxu0 0.0
    %124 = vmatpush2.msra.mxu0 0.0
    %125 = vmatprep.subr.mxu0 0.0
    %126 = vmatpush2.msra.mxu0 0.0
    %127 = vmatprep.subr.mxu0 0.0
    %128 = vmatpush2.msra.mxu0 0.0
    %129 = vmatprep.subr.mxu0 0.0
    %130 = vmatpush2.msra.mxu0 0.0
    %131 = vmatprep.subr.mxu0 0.0
    %132 = vmatpush2.msra.mxu0 0.0
    %133 = vmatprep.subr.mxu0 0.0
    %134 = vmatpush2.msra.mxu0 0.0
    %135 = vmatprep.subr.mxu0 0.0
    %136 = vmatpush2.msra.mxu0 0.0
    %137 = vmatprep.subr.mxu0 0.0
    %138 = vmatpush2.msra.mxu0 0.0
    %139 = vmatprep.subr.mxu0 0.0
    %140 = vmatpush2.msra.mxu0 0.0
    %141 = vmatprep.subr.mxu0 0.0
    %142 = vmatpush2.msra.mxu0 0.0
    %143 = vmatprep.mubr.f32.mxu0 0.0
    %144 = vmatmul.mubr.f32.gmra.mxu0 %v77
    %v145 = vpop.f32.mrf.mxu0
    %v146 = vadd.f32 %v68, %v145
    %v147 = vpop.f32.mrf.mxu0
    %v148 = vadd.f32 %v72, %v147
    %149 = vdwg.mxu0
    %v150 = vmax.f32 %v146, 0.0
    %v151 = vmax.f32 %v148, 0.0
    %v152 = vld [vmem:[#allocation2] sm:$0xff]
    %v153 = vld [vmem:[#allocation2 + $0x8] sm:$0xff]
    %v154 = vld [vmem:[#allocation2 + $0x10] sm:$0xff]
    %v155 = vld [vmem:[#allocation2 + $0x18] sm:$0xff]
    %v156 = vld [vmem:[#allocation2 + $0x20] sm:$0xff]
    %v157 = vld [vmem:[#allocation2 + $0x28] sm:$0xff]
    %v158 = vld [vmem:[#allocation2 + $0x30] sm:$0xff]
    %v159 = vld [vmem:[#allocation2 + $0x38] sm:$0xff]
    %v160 = vld [vmem:[#allocation2 + $0x40] sm:$0xff]
    %v161 = vld [vmem:[#allocation2 + $0x48] sm:$0xff]
    %v162 = vld [vmem:[#allocation2 + $0x50] sm:$0xff]
    %v163 = vld [vmem:[#allocation2 + $0x58] sm:$0xff]
    %v164 = vld [vmem:[#allocation2 + $0x60] sm:$0xff]
    %v165 = vld [vmem:[#allocation2 + $0x68] sm:$0xff]
    %v166 = vld [vmem:[#allocation2 + $0x70] sm:$0xff]
    %v167 = vld [vmem:[#allocation2 + $0x78] sm:$0xff]
    %v168 = vld [vmem:[#allocation2 + $0x80] sm:$0xff]
    %v169 = vld [vmem:[#allocation2 + $0x88] sm:$0xff]
    %v170 = vld [vmem:[#allocation2 + $0x90] sm:$0xff]
    %v171 = vld [vmem:[#allocation2 + $0x98] sm:$0xff]
    %v172 = vld [vmem:[#allocation2 + $0xa0] sm:$0xff]
    %v173 = vld [vmem:[#allocation2 + $0xa8] sm:$0xff]
    %v174 = vld [vmem:[#allocation2 + $0xb0] sm:$0xff]
    %v175 = vld [vmem:[#allocation2 + $0xb8] sm:$0xff]
    %v176 = vld [vmem:[#allocation2 + $0xc0] sm:$0xff]
    %v177 = vld [vmem:[#allocation2 + $0xc8] sm:$0xff]
    %v178 = vld [vmem:[#allocation2 + $0xd0] sm:$0xff]
    %v179 = vld [vmem:[#allocation2 + $0xd8] sm:$0xff]
    %v180 = vld [vmem:[#allocation2 + $0xe0] sm:$0xff]
    %v181 = vld [vmem:[#allocation2 + $0xe8] sm:$0xff]
    %v182 = vld [vmem:[#allocation2 + $0xf0] sm:$0xff]
    %v183 = vld [vmem:[#allocation2 + $0xf8] sm:$0xff]
    %v184 = vld [vmem:[#allocation2 + $0x100] sm:$0xff]
    %v185 = vld [vmem:[#allocation2 + $0x108] sm:$0xff]
    %v186 = vld [vmem:[#allocation2 + $0x110] sm:$0xff]
    %v187 = vld [vmem:[#allocation2 + $0x118] sm:$0xff]
    %v188 = vld [vmem:[#allocation2 + $0x120] sm:$0xff]
    %v189 = vld [vmem:[#allocation2 + $0x128] sm:$0xff]
    %v190 = vld [vmem:[#allocation2 + $0x130] sm:$0xff]
    %v191 = vld [vmem:[#allocation2 + $0x138] sm:$0xff]
    %v192 = vld [vmem:[#allocation2 + $0x140] sm:$0xff]
    %v193 = vld [vmem:[#allocation2 + $0x148] sm:$0xff]
    %v194 = vld [vmem:[#allocation2 + $0x150] sm:$0xff]
    %v195 = vld [vmem:[#allocation2 + $0x158] sm:$0xff]
    %v196 = vld [vmem:[#allocation2 + $0x160] sm:$0xff]
    %v197 = vld [vmem:[#allocation2 + $0x168] sm:$0xff]
    %v198 = vld [vmem:[#allocation2 + $0x170] sm:$0xff]
    %v199 = vld [vmem:[#allocation2 + $0x178] sm:$0xff]
    %v200 = vld [vmem:[#allocation2 + $0x180] sm:$0xff]
    %v201 = vld [vmem:[#allocation2 + $0x188] sm:$0xff]
    %v202 = vld [vmem:[#allocation2 + $0x190] sm:$0xff]
    %v203 = vld [vmem:[#allocation2 + $0x198] sm:$0xff]
    %v204 = vld [vmem:[#allocation2 + $0x1a0] sm:$0xff]
    %v205 = vld [vmem:[#allocation2 + $0x1a8] sm:$0xff]
    %v206 = vld [vmem:[#allocation2 + $0x1b0] sm:$0xff]
    %v207 = vld [vmem:[#allocation2 + $0x1b8] sm:$0xff]
    %v208 = vld [vmem:[#allocation2 + $0x1c0] sm:$0xff]
    %v209 = vld [vmem:[#allocation2 + $0x1c8] sm:$0xff]
    %v210 = vld [vmem:[#allocation2 + $0x1d0] sm:$0xff]
    %v211 = vld [vmem:[#allocation2 + $0x1d8] sm:$0xff]
    %v212 = vld [vmem:[#allocation2 + $0x1e0] sm:$0xff]
    %v213 = vld [vmem:[#allocation2 + $0x1e8] sm:$0xff]
    %v214 = vld [vmem:[#allocation2 + $0x1f0] sm:$0xff]
    %v215 = vld [vmem:[#allocation2 + $0x1f8] sm:$0xff]
    %v216 = vld [vmem:[#allocation2 + $0x200] sm:$0xff]
    %v217 = vld [vmem:[#allocation2 + $0x208] sm:$0xff]
    %v218 = vld [vmem:[#allocation2 + $0x210] sm:$0xff]
    %v219 = vld [vmem:[#allocation2 + $0x218] sm:$0xff]
    %v220 = vld [vmem:[#allocation2 + $0x220] sm:$0xff]
    %v221 = vld [vmem:[#allocation2 + $0x228] sm:$0xff]
    %v222 = vld [vmem:[#allocation2 + $0x230] sm:$0xff]
    %v223 = vld [vmem:[#allocation2 + $0x238] sm:$0xff]
    %v224 = vld [vmem:[#allocation2 + $0x240] sm:$0xff]
    %v225 = vld [vmem:[#allocation2 + $0x248] sm:$0xff]
    %v226 = vld [vmem:[#allocation2 + $0x250] sm:$0xff]
    %v227 = vld [vmem:[#allocation2 + $0x258] sm:$0xff]
    %v228 = vld [vmem:[#allocation2 + $0x260] sm:$0xff]
    %v229 = vld [vmem:[#allocation2 + $0x268] sm:$0xff]
    %v230 = vld [vmem:[#allocation2 + $0x270] sm:$0xff]
    %v231 = vld [vmem:[#allocation2 + $0x278] sm:$0xff]
    %v232 = vld [vmem:[#allocation2 + $0x280] sm:$0xff]
    %v233 = vld [vmem:[#allocation2 + $0x288] sm:$0xff]
    %v234 = vld [vmem:[#allocation2 + $0x290] sm:$0xff]
    %v235 = vld [vmem:[#allocation2 + $0x298] sm:$0xff]
    %v236 = vld [vmem:[#allocation2 + $0x2a0] sm:$0xff]
    %v237 = vld [vmem:[#allocation2 + $0x2a8] sm:$0xff]
    %v238 = vld [vmem:[#allocation2 + $0x2b0] sm:$0xff]
    %v239 = vld [vmem:[#allocation2 + $0x2b8] sm:$0xff]
    %v240 = vld [vmem:[#allocation2 + $0x2c0] sm:$0xff]
    %v241 = vld [vmem:[#allocation2 + $0x2c8] sm:$0xff]
    %v242 = vld [vmem:[#allocation2 + $0x2d0] sm:$0xff]
    %v243 = vld [vmem:[#allocation2 + $0x2d8] sm:$0xff]
    %v244 = vld [vmem:[#allocation2 + $0x2e0] sm:$0xff]
    %v245 = vld [vmem:[#allocation2 + $0x2e8] sm:$0xff]
    %v246 = vld [vmem:[#allocation2 + $0x2f0] sm:$0xff]
    %v247 = vld [vmem:[#allocation2 + $0x2f8] sm:$0xff]
    %v248 = vld [vmem:[#allocation2 + $0x300] sm:$0xff]
    %v249 = vld [vmem:[#allocation2 + $0x308] sm:$0xff]
    %v250 = vld [vmem:[#allocation2 + $0x310] sm:$0xff]
    %v251 = vld [vmem:[#allocation2 + $0x318] sm:$0xff]
    %v252 = vld [vmem:[#allocation2 + $0x320] sm:$0xff]
    %v253 = vld [vmem:[#allocation2 + $0x328] sm:$0xff]
    %v254 = vld [vmem:[#allocation2 + $0x330] sm:$0xff]
    %v255 = vld [vmem:[#allocation2 + $0x338] sm:$0xff]
    %v256 = vld [vmem:[#allocation2 + $0x340] sm:$0xff]
    %v257 = vld [vmem:[#allocation2 + $0x348] sm:$0xff]
    %v258 = vld [vmem:[#allocation2 + $0x350] sm:$0xff]
    %v259 = vld [vmem:[#allocation2 + $0x358] sm:$0xff]
    %v260 = vld [vmem:[#allocation2 + $0x360] sm:$0xff]
    %v261 = vld [vmem:[#allocation2 + $0x368] sm:$0xff]
    %v262 = vld [vmem:[#allocation2 + $0x370] sm:$0xff]
    %v263 = vld [vmem:[#allocation2 + $0x378] sm:$0xff]
    %v264 = vld [vmem:[#allocation2 + $0x380] sm:$0xff]
    %v265 = vld [vmem:[#allocation2 + $0x388] sm:$0xff]
    %v266 = vld [vmem:[#allocation2 + $0x390] sm:$0xff]
    %v267 = vld [vmem:[#allocation2 + $0x398] sm:$0xff]
    %v268 = vld [vmem:[#allocation2 + $0x3a0] sm:$0xff]
    %v269 = vld [vmem:[#allocation2 + $0x3a8] sm:$0xff]
    %v270 = vld [vmem:[#allocation2 + $0x3b0] sm:$0xff]
    %v271 = vld [vmem:[#allocation2 + $0x3b8] sm:$0xff]
    %v272 = vld [vmem:[#allocation2 + $0x3c0] sm:$0xff]
    %v273 = vld [vmem:[#allocation2 + $0x3c8] sm:$0xff]
    %v274 = vld [vmem:[#allocation2 + $0x3d0] sm:$0xff]
    %v275 = vld [vmem:[#allocation2 + $0x3d8] sm:$0xff]
    %v276 = vld [vmem:[#allocation2 + $0x3e0] sm:$0xff]
    %v277 = vld [vmem:[#allocation2 + $0x3e8] sm:$0xff]
    %v278 = vld [vmem:[#allocation2 + $0x3f0] sm:$0xff]
    %v279 = vld [vmem:[#allocation2 + $0x3f8] sm:$0xff]
    %v280 = vld [vmem:[%s4] sm:$0xf]
    %v282 = vlaneseq
    %v283 = vshrl.u32 %v282, 7
    %v284 = vsub.s32 0, %v283
    %v285 = vrot.slane %v280, %v284
    %v286 = vlaneseq
    %v287 = vshrl.u32 %v286, 7
    %v288 = vsub.s32 1, %v287
    %v289 = vrot.slane %v280, %v288
    %v290 = vlaneseq
    %v291 = vshrl.u32 %v290, 7
    %v292 = vsub.s32 2, %v291
    %v293 = vrot.slane %v280, %v292
    %v294 = vlaneseq
    %v295 = vshrl.u32 %v294, 7
    %v296 = vsub.s32 3, %v295
    %v297 = vrot.slane %v280, %v296
    %302 = vmatprep.subr.mxu0 %v213
    %303 = vmatpush1.msra.mxu0 %v212
    %304 = vmatprep.subr.mxu0 %v209
    %305 = vmatpush1.msra.mxu0 %v208
    %306 = vmatprep.subr.mxu0 %v205
    %307 = vmatpush1.msra.mxu0 %v204
    %308 = vmatprep.subr.mxu0 %v201
    %309 = vmatpush1.msra.mxu0 %v200
    %310 = vmatprep.subr.mxu0 %v197
    %311 = vmatpush1.msra.mxu0 %v196
    %312 = vmatprep.subr.mxu0 %v193
    %313 = vmatpush1.msra.mxu0 %v192
    %314 = vmatprep.subr.mxu0 %v189
    %315 = vmatpush1.msra.mxu0 %v188
    %316 = vmatprep.subr.mxu0 %v185
    %317 = vmatpush1.msra.mxu0 %v184
    %318 = vmatprep.subr.mxu0 %v181
    %319 = vmatpush1.msra.mxu0 %v180
    %320 = vmatprep.subr.mxu0 %v177
    %321 = vmatpush1.msra.mxu0 %v176
    %322 = vmatprep.subr.mxu0 %v173
    %323 = vmatpush1.msra.mxu0 %v172
    %324 = vmatprep.subr.mxu0 %v169
    %325 = vmatpush1.msra.mxu0 %v168
    %326 = vmatprep.subr.mxu0 %v165
    %327 = vmatpush1.msra.mxu0 %v164
    %328 = vmatprep.subr.mxu0 %v161
    %329 = vmatpush1.msra.mxu0 %v160
    %330 = vmatprep.subr.mxu0 %v157
    %331 = vmatpush1.msra.mxu0 %v156
    %332 = vmatprep.subr.mxu0 %v153
    %333 = vmatpush1.msra.mxu0 %v152
    %334 = vmatprep.subr.mxu0 %v277
    %335 = vmatpush2.msra.mxu0 %v276
    %336 = vmatprep.subr.mxu0 %v273
    %337 = vmatpush2.msra.mxu0 %v272
    %338 = vmatprep.subr.mxu0 %v269
    %339 = vmatpush2.msra.mxu0 %v268
    %340 = vmatprep.subr.mxu0 %v265
    %341 = vmatpush2.msra.mxu0 %v264
    %342 = vmatprep.subr.mxu0 %v261
    %343 = vmatpush2.msra.mxu0 %v260
    %344 = vmatprep.subr.mxu0 %v257
    %345 = vmatpush2.msra.mxu0 %v256
    %346 = vmatprep.subr.mxu0 %v253
    %347 = vmatpush2.msra.mxu0 %v252
    %348 = vmatprep.subr.mxu0 %v249
    %349 = vmatpush2.msra.mxu0 %v248
    %350 = vmatprep.subr.mxu0 %v245
    %351 = vmatpush2.msra.mxu0 %v244
    %352 = vmatprep.subr.mxu0 %v241
    %353 = vmatpush2.msra.mxu0 %v240
    %354 = vmatprep.subr.mxu0 %v237
    %355 = vmatpush2.msra.mxu0 %v236
    %356 = vmatprep.subr.mxu0 %v233
    %357 = vmatpush2.msra.mxu0 %v232
    %358 = vmatprep.subr.mxu0 %v229
    %359 = vmatpush2.msra.mxu0 %v228
    %360 = vmatprep.subr.mxu0 %v225
    %361 = vmatpush2.msra.mxu0 %v224
    %362 = vmatprep.subr.mxu0 %v221
    %363 = vmatpush2.msra.mxu0 %v220
    %364 = vmatprep.subr.mxu0 %v217
    %365 = vmatpush2.msra.mxu0 %v216
    %366 = vmatprep.mubr.f32.mxu0 %v151
    %367 = vmatmul.mubr.f32.gmra.mxu0 %v150
    %v368 = vpop.f32.mrf.mxu0
    %v369 = vadd.f32 %v285, %v368
    %v370 = vpop.f32.mrf.mxu0
    %v371 = vadd.f32 %v289, %v370
    %372 = vdwg.mxu0
    %373 = vmatprep.subr.mxu0 %v215
    %374 = vmatpush1.msra.mxu0 %v214
    %375 = vmatprep.subr.mxu0 %v211
    %376 = vmatpush1.msra.mxu0 %v210
    %377 = vmatprep.subr.mxu0 %v207
    %378 = vmatpush1.msra.mxu0 %v206
    %379 = vmatprep.subr.mxu0 %v203
    %380 = vmatpush1.msra.mxu0 %v202
    %381 = vmatprep.subr.mxu0 %v199
    %382 = vmatpush1.msra.mxu0 %v198
    %383 = vmatprep.subr.mxu0 %v195
    %384 = vmatpush1.msra.mxu0 %v194
    %385 = vmatprep.subr.mxu0 %v191
    %386 = vmatpush1.msra.mxu0 %v190
    %387 = vmatprep.subr.mxu0 %v187
    %388 = vmatpush1.msra.mxu0 %v186
    %389 = vmatprep.subr.mxu0 %v183
    %390 = vmatpush1.msra.mxu0 %v182
    %391 = vmatprep.subr.mxu0 %v179
    %392 = vmatpush1.msra.mxu0 %v178
    %393 = vmatprep.subr.mxu0 %v175
    %394 = vmatpush1.msra.mxu0 %v174
    %395 = vmatprep.subr.mxu0 %v171
    %396 = vmatpush1.msra.mxu0 %v170
    %397 = vmatprep.subr.mxu0 %v167
    %398 = vmatpush1.msra.mxu0 %v166
    %399 = vmatprep.subr.mxu0 %v163
    %400 = vmatpush1.msra.mxu0 %v162
    %401 = vmatprep.subr.mxu0 %v159
    %402 = vmatpush1.msra.mxu0 %v158
    %403 = vmatprep.subr.mxu0 %v155
    %404 = vmatpush1.msra.mxu0 %v154
    %405 = vmatprep.subr.mxu0 %v279
    %406 = vmatpush2.msra.mxu0 %v278
    %407 = vmatprep.subr.mxu0 %v275
    %408 = vmatpush2.msra.mxu0 %v274
    %409 = vmatprep.subr.mxu0 %v271
    %410 = vmatpush2.msra.mxu0 %v270
    %411 = vmatprep.subr.mxu0 %v267
    %412 = vmatpush2.msra.mxu0 %v266
    %413 = vmatprep.subr.mxu0 %v263
    %414 = vmatpush2.msra.mxu0 %v262
    %415 = vmatprep.subr.mxu0 %v259
    %416 = vmatpush2.msra.mxu0 %v258
    %417 = vmatprep.subr.mxu0 %v255
    %418 = vmatpush2.msra.mxu0 %v254
    %419 = vmatprep.subr.mxu0 %v251
    %420 = vmatpush2.msra.mxu0 %v250
    %421 = vmatprep.subr.mxu0 %v247
    %422 = vmatpush2.msra.mxu0 %v246
    %423 = vmatprep.subr.mxu0 %v243
    %424 = vmatpush2.msra.mxu0 %v242
    %425 = vmatprep.subr.mxu0 %v239
    %426 = vmatpush2.msra.mxu0 %v238
    %427 = vmatprep.subr.mxu0 %v235
    %428 = vmatpush2.msra.mxu0 %v234
    %429 = vmatprep.subr.mxu0 %v231
    %430 = vmatpush2.msra.mxu0 %v230
    %431 = vmatprep.subr.mxu0 %v227
    %432 = vmatpush2.msra.mxu0 %v226
    %433 = vmatprep.subr.mxu0 %v223
    %434 = vmatpush2.msra.mxu0 %v222
    %435 = vmatprep.subr.mxu0 %v219
    %436 = vmatpush2.msra.mxu0 %v218
    %437 = vmatprep.mubr.f32.mxu0 %v151
    %438 = vmatmul.mubr.f32.gmra.mxu0 %v150
    %v439 = vpop.f32.mrf.mxu0
    %v440 = vadd.f32 %v293, %v439
    %v441 = vpop.f32.mrf.mxu0
    %v442 = vadd.f32 %v297, %v441
    %443 = vdwg.mxu0
    %v444 = vld [vmem:[%s5] sm:$0xff]
    %v445 = vld [vmem:[%s5 + $0x8] sm:$0xff]
    %v446 = vld [vmem:[%s5 + $0x10] sm:$0xff]
    %v447 = vld [vmem:[%s5 + $0x18] sm:$0xff]
    %v448 = vld [vmem:[%s5 + $0x20] sm:$0xff]
    %v449 = vld [vmem:[%s5 + $0x28] sm:$0xff]
    %v450 = vld [vmem:[%s5 + $0x30] sm:$0xff]
    %v451 = vld [vmem:[%s5 + $0x38] sm:$0xff]
    %v452 = vld [vmem:[%s5 + $0x40] sm:$0xff]
    %v453 = vld [vmem:[%s5 + $0x48] sm:$0xff]
    %v454 = vld [vmem:[%s5 + $0x50] sm:$0xff]
    %v455 = vld [vmem:[%s5 + $0x58] sm:$0xff]
    %v456 = vld [vmem:[%s5 + $0x60] sm:$0xff]
    %v457 = vld [vmem:[%s5 + $0x68] sm:$0xff]
    %v458 = vld [vmem:[%s5 + $0x70] sm:$0xff]
    %v459 = vld [vmem:[%s5 + $0x78] sm:$0xff]
    %v460 = vld [vmem:[%s5 + $0x80] sm:$0xff]
    %v461 = vld [vmem:[%s5 + $0x88] sm:$0xff]
    %v462 = vld [vmem:[%s5 + $0x90] sm:$0xff]
    %v463 = vld [vmem:[%s5 + $0x98] sm:$0xff]
    %v464 = vld [vmem:[%s5 + $0xa0] sm:$0xff]
    %v465 = vld [vmem:[%s5 + $0xa8] sm:$0xff]
    %v466 = vld [vmem:[%s5 + $0xb0] sm:$0xff]
    %v467 = vld [vmem:[%s5 + $0xb8] sm:$0xff]
    %v468 = vld [vmem:[%s5 + $0xc0] sm:$0xff]
    %v469 = vld [vmem:[%s5 + $0xc8] sm:$0xff]
    %v470 = vld [vmem:[%s5 + $0xd0] sm:$0xff]
    %v471 = vld [vmem:[%s5 + $0xd8] sm:$0xff]
    %v472 = vld [vmem:[%s5 + $0xe0] sm:$0xff]
    %v473 = vld [vmem:[%s5 + $0xe8] sm:$0xff]
    %v474 = vld [vmem:[%s5 + $0xf0] sm:$0xff]
    %v475 = vld [vmem:[%s5 + $0xf8] sm:$0xff]
    %v476 = vld [vmem:[%s5 + $0x100] sm:$0xff]
    %v477 = vld [vmem:[%s5 + $0x108] sm:$0xff]
    %v478 = vld [vmem:[%s5 + $0x110] sm:$0xff]
    %v479 = vld [vmem:[%s5 + $0x118] sm:$0xff]
    %v480 = vld [vmem:[%s5 + $0x120] sm:$0xff]
    %v481 = vld [vmem:[%s5 + $0x128] sm:$0xff]
    %v482 = vld [vmem:[%s5 + $0x130] sm:$0xff]
    %v483 = vld [vmem:[%s5 + $0x138] sm:$0xff]
    %v484 = vld [vmem:[%s5 + $0x140] sm:$0xff]
    %v485 = vld [vmem:[%s5 + $0x148] sm:$0xff]
    %v486 = vld [vmem:[%s5 + $0x150] sm:$0xff]
    %v487 = vld [vmem:[%s5 + $0x158] sm:$0xff]
    %v488 = vld [vmem:[%s5 + $0x160] sm:$0xff]
    %v489 = vld [vmem:[%s5 + $0x168] sm:$0xff]
    %v490 = vld [vmem:[%s5 + $0x170] sm:$0xff]
    %v491 = vld [vmem:[%s5 + $0x178] sm:$0xff]
    %v492 = vld [vmem:[%s5 + $0x180] sm:$0xff]
    %v493 = vld [vmem:[%s5 + $0x188] sm:$0xff]
    %v494 = vld [vmem:[%s5 + $0x190] sm:$0xff]
    %v495 = vld [vmem:[%s5 + $0x198] sm:$0xff]
    %v496 = vld [vmem:[%s5 + $0x1a0] sm:$0xff]
    %v497 = vld [vmem:[%s5 + $0x1a8] sm:$0xff]
    %v498 = vld [vmem:[%s5 + $0x1b0] sm:$0xff]
    %v499 = vld [vmem:[%s5 + $0x1b8] sm:$0xff]
    %v500 = vld [vmem:[%s5 + $0x1c0] sm:$0xff]
    %v501 = vld [vmem:[%s5 + $0x1c8] sm:$0xff]
    %v502 = vld [vmem:[%s5 + $0x1d0] sm:$0xff]
    %v503 = vld [vmem:[%s5 + $0x1d8] sm:$0xff]
    %v504 = vld [vmem:[%s5 + $0x1e0] sm:$0xff]
    %v505 = vld [vmem:[%s5 + $0x1e8] sm:$0xff]
    %v506 = vld [vmem:[%s5 + $0x1f0] sm:$0xff]
    %v507 = vld [vmem:[%s5 + $0x1f8] sm:$0xff]
    %508 = vmatprep.subr.mxu0 0.0
    %509 = vmatpush1.msra.mxu0 %v459
    %510 = vmatprep.subr.mxu0 0.0
    %511 = vmatpush1.msra.mxu0 %v458
    %512 = vmatprep.subr.mxu0 0.0
    %513 = vmatpush1.msra.mxu0 %v457
    %514 = vmatprep.subr.mxu0 0.0
    %515 = vmatpush1.msra.mxu0 %v456
    %516 = vmatprep.subr.mxu0 0.0
    %517 = vmatpush1.msra.mxu0 %v455
    %518 = vmatprep.subr.mxu0 0.0
    %519 = vmatpush1.msra.mxu0 %v454
    %520 = vmatprep.subr.mxu0 0.0
    %521 = vmatpush1.msra.mxu0 %v453
    %522 = vmatprep.subr.mxu0 0.0
    %523 = vmatpush1.msra.mxu0 %v452
    %524 = vmatprep.subr.mxu0 0.0
    %525 = vmatpush1.msra.mxu0 %v451
    %526 = vmatprep.subr.mxu0 0.0
    %527 = vmatpush1.msra.mxu0 %v450
    %528 = vmatprep.subr.mxu0 0.0
    %529 = vmatpush1.msra.mxu0 %v449
    %530 = vmatprep.subr.mxu0 0.0
    %531 = vmatpush1.msra.mxu0 %v448
    %532 = vmatprep.subr.mxu0 0.0
    %533 = vmatpush1.msra.mxu0 %v447
    %534 = vmatprep.subr.mxu0 0.0
    %535 = vmatpush1.msra.mxu0 %v446
    %536 = vmatprep.subr.mxu0 0.0
    %537 = vmatpush1.msra.mxu0 %v445
    %538 = vmatprep.subr.mxu0 0.0
    %539 = vmatpush1.msra.mxu0 %v444
    %540 = vmatprep.subr.mxu0 0.0
    %541 = vmatpush2.msra.mxu0 %v475
    %542 = vmatprep.subr.mxu0 0.0
    %543 = vmatpush2.msra.mxu0 %v474
    %544 = vmatprep.subr.mxu0 0.0
    %545 = vmatpush2.msra.mxu0 %v473
    %546 = vmatprep.subr.mxu0 0.0
    %547 = vmatpush2.msra.mxu0 %v472
    %548 = vmatprep.subr.mxu0 0.0
    %549 = vmatpush2.msra.mxu0 %v471
    %550 = vmatprep.subr.mxu0 0.0
    %551 = vmatpush2.msra.mxu0 %v470
    %552 = vmatprep.subr.mxu0 0.0
    %553 = vmatpush2.msra.mxu0 %v469
    %554 = vmatprep.subr.mxu0 0.0
    %555 = vmatpush2.msra.mxu0 %v468
    %556 = vmatprep.subr.mxu0 0.0
    %557 = vmatpush2.msra.mxu0 %v467
    %558 = vmatprep.subr.mxu0 0.0
    %559 = vmatpush2.msra.mxu0 %v466
    %560 = vmatprep.subr.mxu0 0.0
    %561 = vmatpush2.msra.mxu0 %v465
    %562 = vmatprep.subr.mxu0 0.0
    %563 = vmatpush2.msra.mxu0 %v464
    %564 = vmatprep.subr.mxu0 0.0
    %565 = vmatpush2.msra.mxu0 %v463
    %566 = vmatprep.subr.mxu0 0.0
    %567 = vmatpush2.msra.mxu0 %v462
    %568 = vmatprep.subr.mxu0 0.0
    %569 = vmatpush2.msra.mxu0 %v461
    %570 = vmatprep.subr.mxu0 0.0
    %571 = vmatpush2.msra.mxu0 %v460
    %572 = vmatprep.mubr.f32.mxu0 %v371
    %573 = vmatmul.mubr.f32.gmra.mxu0 %v369
    %v574 = vpop.f32.mrf.mxu0
    %v575 = vadd.f32 0.0, %v574
    %v576 = vpop.f32.mrf.mxu0
    %577 = vdwg.mxu0
    %578 = vmatprep.subr.mxu0 0.0
    %579 = vmatpush1.msra.mxu0 %v491
    %580 = vmatprep.subr.mxu0 0.0
    %581 = vmatpush1.msra.mxu0 %v490
    %582 = vmatprep.subr.mxu0 0.0
    %583 = vmatpush1.msra.mxu0 %v489
    %584 = vmatprep.subr.mxu0 0.0
    %585 = vmatpush1.msra.mxu0 %v488
    %586 = vmatprep.subr.mxu0 0.0
    %587 = vmatpush1.msra.mxu0 %v487
    %588 = vmatprep.subr.mxu0 0.0
    %589 = vmatpush1.msra.mxu0 %v486
    %590 = vmatprep.subr.mxu0 0.0
    %591 = vmatpush1.msra.mxu0 %v485
    %592 = vmatprep.subr.mxu0 0.0
    %593 = vmatpush1.msra.mxu0 %v484
    %594 = vmatprep.subr.mxu0 0.0
    %595 = vmatpush1.msra.mxu0 %v483
    %596 = vmatprep.subr.mxu0 0.0
    %597 = vmatpush1.msra.mxu0 %v482
    %598 = vmatprep.subr.mxu0 0.0
    %599 = vmatpush1.msra.mxu0 %v481
    %600 = vmatprep.subr.mxu0 0.0
    %601 = vmatpush1.msra.mxu0 %v480
    %602 = vmatprep.subr.mxu0 0.0
    %603 = vmatpush1.msra.mxu0 %v479
    %604 = vmatprep.subr.mxu0 0.0
    %605 = vmatpush1.msra.mxu0 %v478
    %606 = vmatprep.subr.mxu0 0.0
    %607 = vmatpush1.msra.mxu0 %v477
    %608 = vmatprep.subr.mxu0 0.0
    %609 = vmatpush1.msra.mxu0 %v476
    %610 = vmatprep.subr.mxu0 0.0
    %611 = vmatpush2.msra.mxu0 %v507
    %612 = vmatprep.subr.mxu0 0.0
    %613 = vmatpush2.msra.mxu0 %v506
    %614 = vmatprep.subr.mxu0 0.0
    %615 = vmatpush2.msra.mxu0 %v505
    %616 = vmatprep.subr.mxu0 0.0
    %617 = vmatpush2.msra.mxu0 %v504
    %618 = vmatprep.subr.mxu0 0.0
    %619 = vmatpush2.msra.mxu0 %v503
    %620 = vmatprep.subr.mxu0 0.0
    %621 = vmatpush2.msra.mxu0 %v502
    %622 = vmatprep.subr.mxu0 0.0
    %623 = vmatpush2.msra.mxu0 %v501
    %624 = vmatprep.subr.mxu0 0.0
    %625 = vmatpush2.msra.mxu0 %v500
    %626 = vmatprep.subr.mxu0 0.0
    %627 = vmatpush2.msra.mxu0 %v499
    %628 = vmatprep.subr.mxu0 0.0
    %629 = vmatpush2.msra.mxu0 %v498
    %630 = vmatprep.subr.mxu0 0.0
    %631 = vmatpush2.msra.mxu0 %v497
    %632 = vmatprep.subr.mxu0 0.0
    %633 = vmatpush2.msra.mxu0 %v496
    %634 = vmatprep.subr.mxu0 0.0
    %635 = vmatpush2.msra.mxu0 %v495
    %636 = vmatprep.subr.mxu0 0.0
    %637 = vmatpush2.msra.mxu0 %v494
    %638 = vmatprep.subr.mxu0 0.0
    %639 = vmatpush2.msra.mxu0 %v493
    %640 = vmatprep.subr.mxu0 0.0
    %641 = vmatpush2.msra.mxu0 %v492
    %642 = vmatprep.mubr.f32.mxu0 %v442
    %643 = vmatmul.mubr.f32.gmra.mxu0 %v440
    %v644 = vpop.f32.mrf.mxu0
    %v645 = vadd.f32 %v575, %v644
    %v646 = vpop.f32.mrf.mxu0
    %647 = vdwg.mxu0
    %v648 = vld [vmem:[%s6] sm:$0xff]
    %v649 = vld [vmem:[%s6 + $0x8] sm:$0xff]
    %v650 = vld [vmem:[%s6 + $0x10] sm:$0xff]
    %v651 = vld [vmem:[%s6 + $0x18] sm:$0xff]
    %v653 = vsel %vm75, %v645, 0
    %655 = vmatprep.subr.mxu0 0.0
    %656 = vmatpush1.msra.mxu0 0.0
    %657 = vmatprep.subr.mxu0 0.0
    %658 = vmatpush1.msra.mxu0 0.0
    %659 = vmatprep.subr.mxu0 0.0
    %660 = vmatpush1.msra.mxu0 0.0
    %661 = vmatprep.subr.mxu0 0.0
    %662 = vmatpush1.msra.mxu0 0.0
    %663 = vmatprep.subr.mxu0 0.0
    %664 = vmatpush1.msra.mxu0 0.0
    %665 = vmatprep.subr.mxu0 0.0
    %666 = vmatpush1.msra.mxu0 0.0
    %667 = vmatprep.subr.mxu0 0.0
    %668 = vmatpush1.msra.mxu0 0.0
    %669 = vmatprep.subr.mxu0 0.0
    %670 = vmatpush1.msra.mxu0 0.0
    %671 = vmatprep.subr.mxu0 0.0
    %672 = vmatpush1.msra.mxu0 0.0
    %673 = vmatprep.subr.mxu0 0.0
    %674 = vmatpush1.msra.mxu0 0.0
    %675 = vmatprep.subr.mxu0 0.0
    %676 = vmatpush1.msra.mxu0 0.0
    %677 = vmatprep.subr.mxu0 0.0
    %678 = vmatpush1.msra.mxu0 0.0
    %679 = vmatprep.subr.mxu0 0.0
    %680 = vmatpush1.msra.mxu0 0.0
    %681 = vmatprep.subr.mxu0 0.0
    %682 = vmatpush1.msra.mxu0 0.0
    %683 = vmatprep.subr.mxu0 0.0
    %684 = vmatpush1.msra.mxu0 0.0
    %685 = vmatprep.subr.mxu0 %v649
    %686 = vmatpush1.msra.mxu0 %v648
    %687 = vmatprep.subr.mxu0 0.0
    %688 = vmatpush2.msra.mxu0 0.0
    %689 = vmatprep.subr.mxu0 0.0
    %690 = vmatpush2.msra.mxu0 0.0
    %691 = vmatprep.subr.mxu0 0.0
    %692 = vmatpush2.msra.mxu0 0.0
    %693 = vmatprep.subr.mxu0 0.0
    %694 = vmatpush2.msra.mxu0 0.0
    %695 = vmatprep.subr.mxu0 0.0
    %696 = vmatpush2.msra.mxu0 0.0
    %697 = vmatprep.subr.mxu0 0.0
    %698 = vmatpush2.msra.mxu0 0.0
    %699 = vmatprep.subr.mxu0 0.0
    %700 = vmatpush2.msra.mxu0 0.0
    %701 = vmatprep.subr.mxu0 0.0
    %702 = vmatpush2.msra.mxu0 0.0
    %703 = vmatprep.subr.mxu0 0.0
    %704 = vmatpush2.msra.mxu0 0.0
    %705 = vmatprep.subr.mxu0 0.0
    %706 = vmatpush2.msra.mxu0 0.0
    %707 = vmatprep.subr.mxu0 0.0
    %708 = vmatpush2.msra.mxu0 0.0
    %709 = vmatprep.subr.mxu0 0.0
    %710 = vmatpush2.msra.mxu0 0.0
    %711 = vmatprep.subr.mxu0 0.0
    %712 = vmatpush2.msra.mxu0 0.0
    %713 = vmatprep.subr.mxu0 0.0
    %714 = vmatpush2.msra.mxu0 0.0
    %715 = vmatprep.subr.mxu0 0.0
    %716 = vmatpush2.msra.mxu0 0.0
    %717 = vmatprep.subr.mxu0 0.0
    %718 = vmatpush2.msra.mxu0 0.0
    %719 = vmatprep.mubr.f32.mxu0 0.0
    %720 = vmatmul.mubr.f32.gmra.mxu0 %v653
    %v721 = vpop.f32.mrf.mxu0
    %v722 = vadd.f32 0.0, %v721
    %v723 = vpop.f32.mrf.mxu0
    %v724 = vadd.f32 0.0, %v723
    %725 = vdwg.mxu0
    %726 = vmatprep.subr.mxu0 0.0
    %727 = vmatpush1.msra.mxu0 0.0
    %728 = vmatprep.subr.mxu0 0.0
    %729 = vmatpush1.msra.mxu0 0.0
    %730 = vmatprep.subr.mxu0 0.0
    %731 = vmatpush1.msra.mxu0 0.0
    %732 = vmatprep.subr.mxu0 0.0
    %733 = vmatpush1.msra.mxu0 0.0
    %734 = vmatprep.subr.mxu0 0.0
    %735 = vmatpush1.msra.mxu0 0.0
    %736 = vmatprep.subr.mxu0 0.0
    %737 = vmatpush1.msra.mxu0 0.0
    %738 = vmatprep.subr.mxu0 0.0
    %739 = vmatpush1.msra.mxu0 0.0
    %740 = vmatprep.subr.mxu0 0.0
    %741 = vmatpush1.msra.mxu0 0.0
    %742 = vmatprep.subr.mxu0 0.0
    %743 = vmatpush1.msra.mxu0 0.0
    %744 = vmatprep.subr.mxu0 0.0
    %745 = vmatpush1.msra.mxu0 0.0
    %746 = vmatprep.subr.mxu0 0.0
    %747 = vmatpush1.msra.mxu0 0.0
    %748 = vmatprep.subr.mxu0 0.0
    %749 = vmatpush1.msra.mxu0 0.0
    %750 = vmatprep.subr.mxu0 0.0
    %751 = vmatpush1.msra.mxu0 0.0
    %752 = vmatprep.subr.mxu0 0.0
    %753 = vmatpush1.msra.mxu0 0.0
    %754 = vmatprep.subr.mxu0 0.0
    %755 = vmatpush1.msra.mxu0 0.0
    %756 = vmatprep.subr.mxu0 %v651
    %757 = vmatpush1.msra.mxu0 %v650
    %758 = vmatprep.subr.mxu0 0.0
    %759 = vmatpush2.msra.mxu0 0.0
    %760 = vmatprep.subr.mxu0 0.0
    %761 = vmatpush2.msra.mxu0 0.0
    %762 = vmatprep.subr.mxu0 0.0
    %763 = vmatpush2.msra.mxu0 0.0
    %764 = vmatprep.subr.mxu0 0.0
    %765 = vmatpush2.msra.mxu0 0.0
    %766 = vmatprep.subr.mxu0 0.0
    %767 = vmatpush2.msra.mxu0 0.0
    %768 = vmatprep.subr.mxu0 0.0
    %769 = vmatpush2.msra.mxu0 0.0
    %770 = vmatprep.subr.mxu0 0.0
    %771 = vmatpush2.msra.mxu0 0.0
    %772 = vmatprep.subr.mxu0 0.0
    %773 = vmatpush2.msra.mxu0 0.0
    %774 = vmatprep.subr.mxu0 0.0
    %775 = vmatpush2.msra.mxu0 0.0
    %776 = vmatprep.subr.mxu0 0.0
    %777 = vmatpush2.msra.mxu0 0.0
    %778 = vmatprep.subr.mxu0 0.0
    %779 = vmatpush2.msra.mxu0 0.0
    %780 = vmatprep.subr.mxu0 0.0
    %781 = vmatpush2.msra.mxu0 0.0
    %782 = vmatprep.subr.mxu0 0.0
    %783 = vmatpush2.msra.mxu0 0.0
    %784 = vmatprep.subr.mxu0 0.0
    %785 = vmatpush2.msra.mxu0 0.0
    %786 = vmatprep.subr.mxu0 0.0
    %787 = vmatpush2.msra.mxu0 0.0
    %788 = vmatprep.subr.mxu0 0.0
    %789 = vmatpush2.msra.mxu0 0.0
    %790 = vmatprep.mubr.f32.mxu0 0.0
    %791 = vmatmul.mubr.f32.gmra.mxu0 %v653
    %v792 = vpop.f32.mrf.mxu0
    %v793 = vadd.f32 0.0, %v792
    %v794 = vpop.f32.mrf.mxu0
    %v795 = vadd.f32 0.0, %v794
    %796 = vdwg.mxu0
    %v797 = vsub.f32 %v369, %v722
    %v798 = vsub.f32 %v371, %v724
    %v799 = vsub.f32 %v440, %v793
    %v800 = vsub.f32 %v442, %v795
    %v801 = vmul.f32 %v797, %v797
    %v802 = vmul.f32 %v798, %v798
    %v803 = vmul.f32 %v799, %v799
    %v804 = vmul.f32 %v800, %v800
    %805 = vmatprep.subr.mxu0 0.0
    %806 = vmatpush1.msra.mxu0 %v459
    %807 = vmatprep.subr.mxu0 0.0
    %808 = vmatpush1.msra.mxu0 %v458
    %809 = vmatprep.subr.mxu0 0.0
    %810 = vmatpush1.msra.mxu0 %v457
    %811 = vmatprep.subr.mxu0 0.0
    %812 = vmatpush1.msra.mxu0 %v456
    %813 = vmatprep.subr.mxu0 0.0
    %814 = vmatpush1.msra.mxu0 %v455
    %815 = vmatprep.subr.mxu0 0.0
    %816 = vmatpush1.msra.mxu0 %v454
    %817 = vmatprep.subr.mxu0 0.0
    %818 = vmatpush1.msra.mxu0 %v453
    %819 = vmatprep.subr.mxu0 0.0
    %820 = vmatpush1.msra.mxu0 %v452
    %821 = vmatprep.subr.mxu0 0.0
    %822 = vmatpush1.msra.mxu0 %v451
    %823 = vmatprep.subr.mxu0 0.0
    %824 = vmatpush1.msra.mxu0 %v450
    %825 = vmatprep.subr.mxu0 0.0
    %826 = vmatpush1.msra.mxu0 %v449
    %827 = vmatprep.subr.mxu0 0.0
    %828 = vmatpush1.msra.mxu0 %v448
    %829 = vmatprep.subr.mxu0 0.0
    %830 = vmatpush1.msra.mxu0 %v447
    %831 = vmatprep.subr.mxu0 0.0
    %832 = vmatpush1.msra.mxu0 %v446
    %833 = vmatprep.subr.mxu0 0.0
    %834 = vmatpush1.msra.mxu0 %v445
    %835 = vmatprep.subr.mxu0 0.0
    %836 = vmatpush1.msra.mxu0 %v444
    %837 = vmatprep.subr.mxu0 0.0
    %838 = vmatpush2.msra.mxu0 %v475
    %839 = vmatprep.subr.mxu0 0.0
    %840 = vmatpush2.msra.mxu0 %v474
    %841 = vmatprep.subr.mxu0 0.0
    %842 = vmatpush2.msra.mxu0 %v473
    %843 = vmatprep.subr.mxu0 0.0
    %844 = vmatpush2.msra.mxu0 %v472
    %845 = vmatprep.subr.mxu0 0.0
    %846 = vmatpush2.msra.mxu0 %v471
    %847 = vmatprep.subr.mxu0 0.0
    %848 = vmatpush2.msra.mxu0 %v470
    %849 = vmatprep.subr.mxu0 0.0
    %850 = vmatpush2.msra.mxu0 %v469
    %851 = vmatprep.subr.mxu0 0.0
    %852 = vmatpush2.msra.mxu0 %v468
    %853 = vmatprep.subr.mxu0 0.0
    %854 = vmatpush2.msra.mxu0 %v467
    %855 = vmatprep.subr.mxu0 0.0
    %856 = vmatpush2.msra.mxu0 %v466
    %857 = vmatprep.subr.mxu0 0.0
    %858 = vmatpush2.msra.mxu0 %v465
    %859 = vmatprep.subr.mxu0 0.0
    %860 = vmatpush2.msra.mxu0 %v464
    %861 = vmatprep.subr.mxu0 0.0
    %862 = vmatpush2.msra.mxu0 %v463
    %863 = vmatprep.subr.mxu0 0.0
    %864 = vmatpush2.msra.mxu0 %v462
    %865 = vmatprep.subr.mxu0 0.0
    %866 = vmatpush2.msra.mxu0 %v461
    %867 = vmatprep.subr.mxu0 0.0
    %868 = vmatpush2.msra.mxu0 %v460
    %869 = vmatprep.mubr.f32.mxu0 %v802
    %870 = vmatmul.mubr.f32.gmra.mxu0 %v801
    %v871 = vpop.f32.mrf.mxu0
    %v872 = vadd.f32 0.0, %v871
    %v873 = vpop.f32.mrf.mxu0
    %874 = vdwg.mxu0
    %875 = vmatprep.subr.mxu0 0.0
    %876 = vmatpush1.msra.mxu0 %v491
    %877 = vmatprep.subr.mxu0 0.0
    %878 = vmatpush1.msra.mxu0 %v490
    %879 = vmatprep.subr.mxu0 0.0
    %880 = vmatpush1.msra.mxu0 %v489
    %881 = vmatprep.subr.mxu0 0.0
    %882 = vmatpush1.msra.mxu0 %v488
    %883 = vmatprep.subr.mxu0 0.0
    %884 = vmatpush1.msra.mxu0 %v487
    %885 = vmatprep.subr.mxu0 0.0
    %886 = vmatpush1.msra.mxu0 %v486
    %887 = vmatprep.subr.mxu0 0.0
    %888 = vmatpush1.msra.mxu0 %v485
    %889 = vmatprep.subr.mxu0 0.0
    %890 = vmatpush1.msra.mxu0 %v484
    %891 = vmatprep.subr.mxu0 0.0
    %892 = vmatpush1.msra.mxu0 %v483
    %893 = vmatprep.subr.mxu0 0.0
    %894 = vmatpush1.msra.mxu0 %v482
    %895 = vmatprep.subr.mxu0 0.0
    %896 = vmatpush1.msra.mxu0 %v481
    %897 = vmatprep.subr.mxu0 0.0
    %898 = vmatpush1.msra.mxu0 %v480
    %899 = vmatprep.subr.mxu0 0.0
    %900 = vmatpush1.msra.mxu0 %v479
    %901 = vmatprep.subr.mxu0 0.0
    %902 = vmatpush1.msra.mxu0 %v478
    %903 = vmatprep.subr.mxu0 0.0
    %904 = vmatpush1.msra.mxu0 %v477
    %905 = vmatprep.subr.mxu0 0.0
    %906 = vmatpush1.msra.mxu0 %v476
    %907 = vmatprep.subr.mxu0 0.0
    %908 = vmatpush2.msra.mxu0 %v507
    %909 = vmatprep.subr.mxu0 0.0
    %910 = vmatpush2.msra.mxu0 %v506
    %911 = vmatprep.subr.mxu0 0.0
    %912 = vmatpush2.msra.mxu0 %v505
    %913 = vmatprep.subr.mxu0 0.0
    %914 = vmatpush2.msra.mxu0 %v504
    %915 = vmatprep.subr.mxu0 0.0
    %916 = vmatpush2.msra.mxu0 %v503
    %917 = vmatprep.subr.mxu0 0.0
    %918 = vmatpush2.msra.mxu0 %v502
    %919 = vmatprep.subr.mxu0 0.0
    %920 = vmatpush2.msra.mxu0 %v501
    %921 = vmatprep.subr.mxu0 0.0
    %922 = vmatpush2.msra.mxu0 %v500
    %923 = vmatprep.subr.mxu0 0.0
    %924 = vmatpush2.msra.mxu0 %v499
    %925 = vmatprep.subr.mxu0 0.0
    %926 = vmatpush2.msra.mxu0 %v498
    %927 = vmatprep.subr.mxu0 0.0
    %928 = vmatpush2.msra.mxu0 %v497
    %929 = vmatprep.subr.mxu0 0.0
    %930 = vmatpush2.msra.mxu0 %v496
    %931 = vmatprep.subr.mxu0 0.0
    %932 = vmatpush2.msra.mxu0 %v495
    %933 = vmatprep.subr.mxu0 0.0
    %934 = vmatpush2.msra.mxu0 %v494
    %935 = vmatprep.subr.mxu0 0.0
    %936 = vmatpush2.msra.mxu0 %v493
    %937 = vmatprep.subr.mxu0 0.0
    %938 = vmatpush2.msra.mxu0 %v492
    %939 = vmatprep.mubr.f32.mxu0 %v804
    %940 = vmatmul.mubr.f32.gmra.mxu0 %v803
    %v941 = vpop.f32.mrf.mxu0
    %v942 = vadd.f32 %v872, %v941
    %v943 = vpop.f32.mrf.mxu0
    %944 = vdwg.mxu0
    %v946 = vsel %vm75, %v942, 0
    %948 = vmatprep.subr.mxu0 0.0
    %949 = vmatpush1.msra.mxu0 0.0
    %950 = vmatprep.subr.mxu0 0.0
    %951 = vmatpush1.msra.mxu0 0.0
    %952 = vmatprep.subr.mxu0 0.0
    %953 = vmatpush1.msra.mxu0 0.0
    %954 = vmatprep.subr.mxu0 0.0
    %955 = vmatpush1.msra.mxu0 0.0
    %956 = vmatprep.subr.mxu0 0.0
    %957 = vmatpush1.msra.mxu0 0.0
    %958 = vmatprep.subr.mxu0 0.0
    %959 = vmatpush1.msra.mxu0 0.0
    %960 = vmatprep.subr.mxu0 0.0
    %961 = vmatpush1.msra.mxu0 0.0
    %962 = vmatprep.subr.mxu0 0.0
    %963 = vmatpush1.msra.mxu0 0.0
    %964 = vmatprep.subr.mxu0 0.0
    %965 = vmatpush1.msra.mxu0 0.0
    %966 = vmatprep.subr.mxu0 0.0
    %967 = vmatpush1.msra.mxu0 0.0
    %968 = vmatprep.subr.mxu0 0.0
    %969 = vmatpush1.msra.mxu0 0.0
    %970 = vmatprep.subr.mxu0 0.0
    %971 = vmatpush1.msra.mxu0 0.0
    %972 = vmatprep.subr.mxu0 0.0
    %973 = vmatpush1.msra.mxu0 0.0
    %974 = vmatprep.subr.mxu0 0.0
    %975 = vmatpush1.msra.mxu0 0.0
    %976 = vmatprep.subr.mxu0 0.0
    %977 = vmatpush1.msra.mxu0 0.0
    %978 = vmatprep.subr.mxu0 %v649
    %979 = vmatpush1.msra.mxu0 %v648
    %980 = vmatprep.subr.mxu0 0.0
    %981 = vmatpush2.msra.mxu0 0.0
    %982 = vmatprep.subr.mxu0 0.0
    %983 = vmatpush2.msra.mxu0 0.0
    %984 = vmatprep.subr.mxu0 0.0
    %985 = vmatpush2.msra.mxu0 0.0
    %986 = vmatprep.subr.mxu0 0.0
    %987 = vmatpush2.msra.mxu0 0.0
    %988 = vmatprep.subr.mxu0 0.0
    %989 = vmatpush2.msra.mxu0 0.0
    %990 = vmatprep.subr.mxu0 0.0
    %991 = vmatpush2.msra.mxu0 0.0
    %992 = vmatprep.subr.mxu0 0.0
    %993 = vmatpush2.msra.mxu0 0.0
    %994 = vmatprep.subr.mxu0 0.0
    %995 = vmatpush2.msra.mxu0 0.0
    %996 = vmatprep.subr.mxu0 0.0
    %997 = vmatpush2.msra.mxu0 0.0
    %998 = vmatprep.subr.mxu0 0.0
    %999 = vmatpush2.msra.mxu0 0.0
    %1000 = vmatprep.subr.mxu0 0.0
    %1001 = vmatpush2.msra.mxu0 0.0
    %1002 = vmatprep.subr.mxu0 0.0
    %1003 = vmatpush2.msra.mxu0 0.0
    %1004 = vmatprep.subr.mxu0 0.0
    %1005 = vmatpush2.msra.mxu0 0.0
    %1006 = vmatprep.subr.mxu0 0.0
    %1007 = vmatpush2.msra.mxu0 0.0
    %1008 = vmatprep.subr.mxu0 0.0
    %1009 = vmatpush2.msra.mxu0 0.0
    %1010 = vmatprep.subr.mxu0 0.0
    %1011 = vmatpush2.msra.mxu0 0.0
    %1012 = vmatprep.mubr.f32.mxu0 0.0
    %1013 = vmatmul.mubr.f32.gmra.mxu0 %v946
    %v1014 = vpop.f32.mrf.mxu0
    %v1015 = vadd.f32 1e-05, %v1014
    %v1016 = vpop.f32.mrf.mxu0
    %v1017 = vadd.f32 1e-05, %v1016
    %1018 = vdwg.mxu0
    %1019 = vmatprep.subr.mxu0 0.0
    %1020 = vmatpush1.msra.mxu0 0.0
    %1021 = vmatprep.subr.mxu0 0.0
    %1022 = vmatpush1.msra.mxu0 0.0
    %1023 = vmatprep.subr.mxu0 0.0
    %1024 = vmatpush1.msra.mxu0 0.0
    %1025 = vmatprep.subr.mxu0 0.0
    %1026 = vmatpush1.msra.mxu0 0.0
    %1027 = vmatprep.subr.mxu0 0.0
    %1028 = vmatpush1.msra.mxu0 0.0
    %1029 = vmatprep.subr.mxu0 0.0
    %1030 = vmatpush1.msra.mxu0 0.0
    %1031 = vmatprep.subr.mxu0 0.0
    %1032 = vmatpush1.msra.mxu0 0.0
    %1033 = vmatprep.subr.mxu0 0.0
    %1034 = vmatpush1.msra.mxu0 0.0
    %1035 = vmatprep.subr.mxu0 0.0
    %1036 = vmatpush1.msra.mxu0 0.0
    %1037 = vmatprep.subr.mxu0 0.0
    %1038 = vmatpush1.msra.mxu0 0.0
    %1039 = vmatprep.subr.mxu0 0.0
    %1040 = vmatpush1.msra.mxu0 0.0
    %1041 = vmatprep.subr.mxu0 0.0
    %1042 = vmatpush1.msra.mxu0 0.0
    %1043 = vmatprep.subr.mxu0 0.0
    %1044 = vmatpush1.msra.mxu0 0.0
    %1045 = vmatprep.subr.mxu0 0.0
    %1046 = vmatpush1.msra.mxu0 0.0
    %1047 = vmatprep.subr.mxu0 0.0
    %1048 = vmatpush1.msra.mxu0 0.0
    %1049 = vmatprep.subr.mxu0 %v651
    %1050 = vmatpush1.msra.mxu0 %v650
    %1051 = vmatprep.subr.mxu0 0.0
    %1052 = vmatpush2.msra.mxu0 0.0
    %1053 = vmatprep.subr.mxu0 0.0
    %1054 = vmatpush2.msra.mxu0 0.0
    %1055 = vmatprep.subr.mxu0 0.0
    %1056 = vmatpush2.msra.mxu0 0.0
    %1057 = vmatprep.subr.mxu0 0.0
    %1058 = vmatpush2.msra.mxu0 0.0
    %1059 = vmatprep.subr.mxu0 0.0
    %1060 = vmatpush2.msra.mxu0 0.0
    %1061 = vmatprep.subr.mxu0 0.0
    %1062 = vmatpush2.msra.mxu0 0.0
    %1063 = vmatprep.subr.mxu0 0.0
    %1064 = vmatpush2.msra.mxu0 0.0
    %1065 = vmatprep.subr.mxu0 0.0
    %1066 = vmatpush2.msra.mxu0 0.0
    %1067 = vmatprep.subr.mxu0 0.0
    %1068 = vmatpush2.msra.mxu0 0.0
    %1069 = vmatprep.subr.mxu0 0.0
    %1070 = vmatpush2.msra.mxu0 0.0
    %1071 = vmatprep.subr.mxu0 0.0
    %1072 = vmatpush2.msra.mxu0 0.0
    %1073 = vmatprep.subr.mxu0 0.0
    %1074 = vmatpush2.msra.mxu0 0.0
    %1075 = vmatprep.subr.mxu0 0.0
    %1076 = vmatpush2.msra.mxu0 0.0
    %1077 = vmatprep.subr.mxu0 0.0
    %1078 = vmatpush2.msra.mxu0 0.0
    %1079 = vmatprep.subr.mxu0 0.0
    %1080 = vmatpush2.msra.mxu0 0.0
    %1081 = vmatprep.subr.mxu0 0.0
    %1082 = vmatpush2.msra.mxu0 0.0
    %1083 = vmatprep.mubr.f32.mxu0 0.0
    %1084 = vmatmul.mubr.f32.gmra.mxu0 %v946
    %v1085 = vpop.f32.mrf.mxu0
    %v1086 = vadd.f32 1e-05, %v1085
    %v1087 = vpop.f32.mrf.mxu0
    %v1088 = vadd.f32 1e-05, %v1087
    %1089 = vdwg.mxu0
    %v1090 = vrsqrt.pop %v1015
    %v1091 = vrsqrt.pop %v1017
    %v1092 = vrsqrt.pop %v1086
    %v1093 = vrsqrt.pop %v1088
    %v1094 = vmul.f32 %v797, %v1090
    %v1095 = vmul.f32 %v798, %v1091
    %v1096 = vmul.f32 %v799, %v1092
    %v1097 = vmul.f32 %v800, %v1093
    %vm1098 = vcmp.ge.f32.partialorder %v1094, 0.0
    %vm1099 = vcmp.ge.f32.partialorder %v1095, 0.0
    %vm1100 = vcmp.ge.f32.partialorder %v1096, 0.0
    %vm1101 = vcmp.ge.f32.partialorder %v1097, 0.0
    %v1102 = vmul.f32 %v1094, 0.01
    %v1103 = vmul.f32 %v1095, 0.01
    %v1104 = vmul.f32 %v1096, 0.01
    %v1105 = vmul.f32 %v1097, 0.01
    %v1106 = vsel %vm1098, %v1094, %v1102
    %v1107 = vsel %vm1099, %v1095, %v1103
    %v1108 = vsel %vm1100, %v1096, %v1104
    %v1109 = vsel %vm1101, %v1097, %v1105
    %v1110 = vld [vmem:[#allocation4] sm:$0xff]
    %v1111 = vld [vmem:[#allocation4 + $0x8] sm:$0xff]
    %v1112 = vld [vmem:[#allocation4 + $0x10] sm:$0xff]
    %v1113 = vld [vmem:[#allocation4 + $0x18] sm:$0xff]
    %v1114 = vld [vmem:[#allocation4 + $0x20] sm:$0xff]
    %v1115 = vld [vmem:[#allocation4 + $0x28] sm:$0xff]
    %v1116 = vld [vmem:[#allocation4 + $0x30] sm:$0xff]
    %v1117 = vld [vmem:[#allocation4 + $0x38] sm:$0xff]
    %v1118 = vld [vmem:[#allocation4 + $0x40] sm:$0xff]
    %v1119 = vld [vmem:[#allocation4 + $0x48] sm:$0xff]
    %v1120 = vld [vmem:[#allocation4 + $0x50] sm:$0xff]
    %v1121 = vld [vmem:[#allocation4 + $0x58] sm:$0xff]
    %v1122 = vld [vmem:[#allocation4 + $0x60] sm:$0xff]
    %v1123 = vld [vmem:[#allocation4 + $0x68] sm:$0xff]
    %v1124 = vld [vmem:[#allocation4 + $0x70] sm:$0xff]
    %v1125 = vld [vmem:[#allocation4 + $0x78] sm:$0xff]
    %v1126 = vld [vmem:[#allocation4 + $0x80] sm:$0xff]
    %v1127 = vld [vmem:[#allocation4 + $0x88] sm:$0xff]
    %v1128 = vld [vmem:[#allocation4 + $0x90] sm:$0xff]
    %v1129 = vld [vmem:[#allocation4 + $0x98] sm:$0xff]
    %v1130 = vld [vmem:[#allocation4 + $0xa0] sm:$0xff]
    %v1131 = vld [vmem:[#allocation4 + $0xa8] sm:$0xff]
    %v1132 = vld [vmem:[#allocation4 + $0xb0] sm:$0xff]
    %v1133 = vld [vmem:[#allocation4 + $0xb8] sm:$0xff]
    %v1134 = vld [vmem:[#allocation4 + $0xc0] sm:$0xff]
    %v1135 = vld [vmem:[#allocation4 + $0xc8] sm:$0xff]
    %v1136 = vld [vmem:[#allocation4 + $0xd0] sm:$0xff]
    %v1137 = vld [vmem:[#allocation4 + $0xd8] sm:$0xff]
    %v1138 = vld [vmem:[#allocation4 + $0xe0] sm:$0xff]
    %v1139 = vld [vmem:[#allocation4 + $0xe8] sm:$0xff]
    %v1140 = vld [vmem:[#allocation4 + $0xf0] sm:$0xff]
    %v1141 = vld [vmem:[#allocation4 + $0xf8] sm:$0xff]
    %v1142 = vld [vmem:[#allocation4 + $0x100] sm:$0xff]
    %v1143 = vld [vmem:[#allocation4 + $0x108] sm:$0xff]
    %v1144 = vld [vmem:[#allocation4 + $0x110] sm:$0xff]
    %v1145 = vld [vmem:[#allocation4 + $0x118] sm:$0xff]
    %v1146 = vld [vmem:[#allocation4 + $0x120] sm:$0xff]
    %v1147 = vld [vmem:[#allocation4 + $0x128] sm:$0xff]
    %v1148 = vld [vmem:[#allocation4 + $0x130] sm:$0xff]
    %v1149 = vld [vmem:[#allocation4 + $0x138] sm:$0xff]
    %v1150 = vld [vmem:[#allocation4 + $0x140] sm:$0xff]
    %v1151 = vld [vmem:[#allocation4 + $0x148] sm:$0xff]
    %v1152 = vld [vmem:[#allocation4 + $0x150] sm:$0xff]
    %v1153 = vld [vmem:[#allocation4 + $0x158] sm:$0xff]
    %v1154 = vld [vmem:[#allocation4 + $0x160] sm:$0xff]
    %v1155 = vld [vmem:[#allocation4 + $0x168] sm:$0xff]
    %v1156 = vld [vmem:[#allocation4 + $0x170] sm:$0xff]
    %v1157 = vld [vmem:[#allocation4 + $0x178] sm:$0xff]
    %v1158 = vld [vmem:[#allocation4 + $0x180] sm:$0xff]
    %v1159 = vld [vmem:[#allocation4 + $0x188] sm:$0xff]
    %v1160 = vld [vmem:[#allocation4 + $0x190] sm:$0xff]
    %v1161 = vld [vmem:[#allocation4 + $0x198] sm:$0xff]
    %v1162 = vld [vmem:[#allocation4 + $0x1a0] sm:$0xff]
    %v1163 = vld [vmem:[#allocation4 + $0x1a8] sm:$0xff]
    %v1164 = vld [vmem:[#allocation4 + $0x1b0] sm:$0xff]
    %v1165 = vld [vmem:[#allocation4 + $0x1b8] sm:$0xff]
    %v1166 = vld [vmem:[#allocation4 + $0x1c0] sm:$0xff]
    %v1167 = vld [vmem:[#allocation4 + $0x1c8] sm:$0xff]
    %v1168 = vld [vmem:[#allocation4 + $0x1d0] sm:$0xff]
    %v1169 = vld [vmem:[#allocation4 + $0x1d8] sm:$0xff]
    %v1170 = vld [vmem:[#allocation4 + $0x1e0] sm:$0xff]
    %v1171 = vld [vmem:[#allocation4 + $0x1e8] sm:$0xff]
    %v1172 = vld [vmem:[#allocation4 + $0x1f0] sm:$0xff]
    %v1173 = vld [vmem:[#allocation4 + $0x1f8] sm:$0xff]
    %v1174 = vld [vmem:[#allocation4 + $0x200] sm:$0xff]
    %v1175 = vld [vmem:[#allocation4 + $0x208] sm:$0xff]
    %v1176 = vld [vmem:[#allocation4 + $0x210] sm:$0xff]
    %v1177 = vld [vmem:[#allocation4 + $0x218] sm:$0xff]
    %v1178 = vld [vmem:[#allocation4 + $0x220] sm:$0xff]
    %v1179 = vld [vmem:[#allocation4 + $0x228] sm:$0xff]
    %v1180 = vld [vmem:[#allocation4 + $0x230] sm:$0xff]
    %v1181 = vld [vmem:[#allocation4 + $0x238] sm:$0xff]
    %v1182 = vld [vmem:[#allocation4 + $0x240] sm:$0xff]
    %v1183 = vld [vmem:[#allocation4 + $0x248] sm:$0xff]
    %v1184 = vld [vmem:[#allocation4 + $0x250] sm:$0xff]
    %v1185 = vld [vmem:[#allocation4 + $0x258] sm:$0xff]
    %v1186 = vld [vmem:[#allocation4 + $0x260] sm:$0xff]
    %v1187 = vld [vmem:[#allocation4 + $0x268] sm:$0xff]
    %v1188 = vld [vmem:[#allocation4 + $0x270] sm:$0xff]
    %v1189 = vld [vmem:[#allocation4 + $0x278] sm:$0xff]
    %v1190 = vld [vmem:[#allocation4 + $0x280] sm:$0xff]
    %v1191 = vld [vmem:[#allocation4 + $0x288] sm:$0xff]
    %v1192 = vld [vmem:[#allocation4 + $0x290] sm:$0xff]
    %v1193 = vld [vmem:[#allocation4 + $0x298] sm:$0xff]
    %v1194 = vld [vmem:[#allocation4 + $0x2a0] sm:$0xff]
    %v1195 = vld [vmem:[#allocation4 + $0x2a8] sm:$0xff]
    %v1196 = vld [vmem:[#allocation4 + $0x2b0] sm:$0xff]
    %v1197 = vld [vmem:[#allocation4 + $0x2b8] sm:$0xff]
    %v1198 = vld [vmem:[#allocation4 + $0x2c0] sm:$0xff]
    %v1199 = vld [vmem:[#allocation4 + $0x2c8] sm:$0xff]
    %v1200 = vld [vmem:[#allocation4 + $0x2d0] sm:$0xff]
    %v1201 = vld [vmem:[#allocation4 + $0x2d8] sm:$0xff]
    %v1202 = vld [vmem:[#allocation4 + $0x2e0] sm:$0xff]
    %v1203 = vld [vmem:[#allocation4 + $0x2e8] sm:$0xff]
    %v1204 = vld [vmem:[#allocation4 + $0x2f0] sm:$0xff]
    %v1205 = vld [vmem:[#allocation4 + $0x2f8] sm:$0xff]
    %v1206 = vld [vmem:[#allocation4 + $0x300] sm:$0xff]
    %v1207 = vld [vmem:[#allocation4 + $0x308] sm:$0xff]
    %v1208 = vld [vmem:[#allocation4 + $0x310] sm:$0xff]
    %v1209 = vld [vmem:[#allocation4 + $0x318] sm:$0xff]
    %v1210 = vld [vmem:[#allocation4 + $0x320] sm:$0xff]
    %v1211 = vld [vmem:[#allocation4 + $0x328] sm:$0xff]
    %v1212 = vld [vmem:[#allocation4 + $0x330] sm:$0xff]
    %v1213 = vld [vmem:[#allocation4 + $0x338] sm:$0xff]
    %v1214 = vld [vmem:[#allocation4 + $0x340] sm:$0xff]
    %v1215 = vld [vmem:[#allocation4 + $0x348] sm:$0xff]
    %v1216 = vld [vmem:[#allocation4 + $0x350] sm:$0xff]
    %v1217 = vld [vmem:[#allocation4 + $0x358] sm:$0xff]
    %v1218 = vld [vmem:[#allocation4 + $0x360] sm:$0xff]
    %v1219 = vld [vmem:[#allocation4 + $0x368] sm:$0xff]
    %v1220 = vld [vmem:[#allocation4 + $0x370] sm:$0xff]
    %v1221 = vld [vmem:[#allocation4 + $0x378] sm:$0xff]
    %v1222 = vld [vmem:[#allocation4 + $0x380] sm:$0xff]
    %v1223 = vld [vmem:[#allocation4 + $0x388] sm:$0xff]
    %v1224 = vld [vmem:[#allocation4 + $0x390] sm:$0xff]
    %v1225 = vld [vmem:[#allocation4 + $0x398] sm:$0xff]
    %v1226 = vld [vmem:[#allocation4 + $0x3a0] sm:$0xff]
    %v1227 = vld [vmem:[#allocation4 + $0x3a8] sm:$0xff]
    %v1228 = vld [vmem:[#allocation4 + $0x3b0] sm:$0xff]
    %v1229 = vld [vmem:[#allocation4 + $0x3b8] sm:$0xff]
    %v1230 = vld [vmem:[#allocation4 + $0x3c0] sm:$0xff]
    %v1231 = vld [vmem:[#allocation4 + $0x3c8] sm:$0xff]
    %v1232 = vld [vmem:[#allocation4 + $0x3d0] sm:$0xff]
    %v1233 = vld [vmem:[#allocation4 + $0x3d8] sm:$0xff]
    %v1234 = vld [vmem:[#allocation4 + $0x3e0] sm:$0xff]
    %v1235 = vld [vmem:[#allocation4 + $0x3e8] sm:$0xff]
    %v1236 = vld [vmem:[#allocation4 + $0x3f0] sm:$0xff]
    %v1237 = vld [vmem:[#allocation4 + $0x3f8] sm:$0xff]
    %v1238 = vld [vmem:[%s8] sm:$0x3]
    %v1240 = vlaneseq
    %v1241 = vshrl.u32 %v1240, 7
    %v1242 = vsub.s32 0, %v1241
    %v1243 = vrot.slane %v1238, %v1242
    %v1244 = vlaneseq
    %v1245 = vshrl.u32 %v1244, 7
    %v1246 = vsub.s32 1, %v1245
    %v1247 = vrot.slane %v1238, %v1246
    %1250 = vmatprep.subr.mxu0 %v1141
    %1251 = vmatpush1.msra.mxu0 %v1140
    %1252 = vmatprep.subr.mxu0 %v1139
    %1253 = vmatpush1.msra.mxu0 %v1138
    %1254 = vmatprep.subr.mxu0 %v1137
    %1255 = vmatpush1.msra.mxu0 %v1136
    %1256 = vmatprep.subr.mxu0 %v1135
    %1257 = vmatpush1.msra.mxu0 %v1134
    %1258 = vmatprep.subr.mxu0 %v1133
    %1259 = vmatpush1.msra.mxu0 %v1132
    %1260 = vmatprep.subr.mxu0 %v1131
    %1261 = vmatpush1.msra.mxu0 %v1130
    %1262 = vmatprep.subr.mxu0 %v1129
    %1263 = vmatpush1.msra.mxu0 %v1128
    %1264 = vmatprep.subr.mxu0 %v1127
    %1265 = vmatpush1.msra.mxu0 %v1126
    %1266 = vmatprep.subr.mxu0 %v1125
    %1267 = vmatpush1.msra.mxu0 %v1124
    %1268 = vmatprep.subr.mxu0 %v1123
    %1269 = vmatpush1.msra.mxu0 %v1122
    %1270 = vmatprep.subr.mxu0 %v1121
    %1271 = vmatpush1.msra.mxu0 %v1120
    %1272 = vmatprep.subr.mxu0 %v1119
    %1273 = vmatpush1.msra.mxu0 %v1118
    %1274 = vmatprep.subr.mxu0 %v1117
    %1275 = vmatpush1.msra.mxu0 %v1116
    %1276 = vmatprep.subr.mxu0 %v1115
    %1277 = vmatpush1.msra.mxu0 %v1114
    %1278 = vmatprep.subr.mxu0 %v1113
    %1279 = vmatpush1.msra.mxu0 %v1112
    %1280 = vmatprep.subr.mxu0 %v1111
    %1281 = vmatpush1.msra.mxu0 %v1110
    %1282 = vmatprep.subr.mxu0 %v1173
    %1283 = vmatpush2.msra.mxu0 %v1172
    %1284 = vmatprep.subr.mxu0 %v1171
    %1285 = vmatpush2.msra.mxu0 %v1170
    %1286 = vmatprep.subr.mxu0 %v1169
    %1287 = vmatpush2.msra.mxu0 %v1168
    %1288 = vmatprep.subr.mxu0 %v1167
    %1289 = vmatpush2.msra.mxu0 %v1166
    %1290 = vmatprep.subr.mxu0 %v1165
    %1291 = vmatpush2.msra.mxu0 %v1164
    %1292 = vmatprep.subr.mxu0 %v1163
    %1293 = vmatpush2.msra.mxu0 %v1162
    %1294 = vmatprep.subr.mxu0 %v1161
    %1295 = vmatpush2.msra.mxu0 %v1160
    %1296 = vmatprep.subr.mxu0 %v1159
    %1297 = vmatpush2.msra.mxu0 %v1158
    %1298 = vmatprep.subr.mxu0 %v1157
    %1299 = vmatpush2.msra.mxu0 %v1156
    %1300 = vmatprep.subr.mxu0 %v1155
    %1301 = vmatpush2.msra.mxu0 %v1154
    %1302 = vmatprep.subr.mxu0 %v1153
    %1303 = vmatpush2.msra.mxu0 %v1152
    %1304 = vmatprep.subr.mxu0 %v1151
    %1305 = vmatpush2.msra.mxu0 %v1150
    %1306 = vmatprep.subr.mxu0 %v1149
    %1307 = vmatpush2.msra.mxu0 %v1148
    %1308 = vmatprep.subr.mxu0 %v1147
    %1309 = vmatpush2.msra.mxu0 %v1146
    %1310 = vmatprep.subr.mxu0 %v1145
    %1311 = vmatpush2.msra.mxu0 %v1144
    %1312 = vmatprep.subr.mxu0 %v1143
    %1313 = vmatpush2.msra.mxu0 %v1142
    %1314 = vmatprep.mubr.f32.mxu0 %v1107
    %1315 = vmatmul.mubr.f32.gmra.mxu0 %v1106
    %v1316 = vpop.f32.mrf.mxu0
    %v1317 = vadd.f32 %v1243, %v1316
    %v1318 = vpop.f32.mrf.mxu0
    %v1319 = vadd.f32 %v1247, %v1318
    %1320 = vdwg.mxu0
    %1321 = vmatprep.subr.mxu0 %v1205
    %1322 = vmatpush1.msra.mxu0 %v1204
    %1323 = vmatprep.subr.mxu0 %v1203
    %1324 = vmatpush1.msra.mxu0 %v1202
    %1325 = vmatprep.subr.mxu0 %v1201
    %1326 = vmatpush1.msra.mxu0 %v1200
    %1327 = vmatprep.subr.mxu0 %v1199
    %1328 = vmatpush1.msra.mxu0 %v1198
    %1329 = vmatprep.subr.mxu0 %v1197
    %1330 = vmatpush1.msra.mxu0 %v1196
    %1331 = vmatprep.subr.mxu0 %v1195
    %1332 = vmatpush1.msra.mxu0 %v1194
    %1333 = vmatprep.subr.mxu0 %v1193
    %1334 = vmatpush1.msra.mxu0 %v1192
    %1335 = vmatprep.subr.mxu0 %v1191
    %1336 = vmatpush1.msra.mxu0 %v1190
    %1337 = vmatprep.subr.mxu0 %v1189
    %1338 = vmatpush1.msra.mxu0 %v1188
    %1339 = vmatprep.subr.mxu0 %v1187
    %1340 = vmatpush1.msra.mxu0 %v1186
    %1341 = vmatprep.subr.mxu0 %v1185
    %1342 = vmatpush1.msra.mxu0 %v1184
    %1343 = vmatprep.subr.mxu0 %v1183
    %1344 = vmatpush1.msra.mxu0 %v1182
    %1345 = vmatprep.subr.mxu0 %v1181
    %1346 = vmatpush1.msra.mxu0 %v1180
    %1347 = vmatprep.subr.mxu0 %v1179
    %1348 = vmatpush1.msra.mxu0 %v1178
    %1349 = vmatprep.subr.mxu0 %v1177
    %1350 = vmatpush1.msra.mxu0 %v1176
    %1351 = vmatprep.subr.mxu0 %v1175
    %1352 = vmatpush1.msra.mxu0 %v1174
    %1353 = vmatprep.subr.mxu0 %v1237
    %1354 = vmatpush2.msra.mxu0 %v1236
    %1355 = vmatprep.subr.mxu0 %v1235
    %1356 = vmatpush2.msra.mxu0 %v1234
    %1357 = vmatprep.subr.mxu0 %v1233
    %1358 = vmatpush2.msra.mxu0 %v1232
    %1359 = vmatprep.subr.mxu0 %v1231
    %1360 = vmatpush2.msra.mxu0 %v1230
    %1361 = vmatprep.subr.mxu0 %v1229
    %1362 = vmatpush2.msra.mxu0 %v1228
    %1363 = vmatprep.subr.mxu0 %v1227
    %1364 = vmatpush2.msra.mxu0 %v1226
    %1365 = vmatprep.subr.mxu0 %v1225
    %1366 = vmatpush2.msra.mxu0 %v1224
    %1367 = vmatprep.subr.mxu0 %v1223
    %1368 = vmatpush2.msra.mxu0 %v1222
    %1369 = vmatprep.subr.mxu0 %v1221
    %1370 = vmatpush2.msra.mxu0 %v1220
    %1371 = vmatprep.subr.mxu0 %v1219
    %1372 = vmatpush2.msra.mxu0 %v1218
    %1373 = vmatprep.subr.mxu0 %v1217
    %1374 = vmatpush2.msra.mxu0 %v1216
    %1375 = vmatprep.subr.mxu0 %v1215
    %1376 = vmatpush2.msra.mxu0 %v1214
    %1377 = vmatprep.subr.mxu0 %v1213
    %1378 = vmatpush2.msra.mxu0 %v1212
    %1379 = vmatprep.subr.mxu0 %v1211
    %1380 = vmatpush2.msra.mxu0 %v1210
    %1381 = vmatprep.subr.mxu0 %v1209
    %1382 = vmatpush2.msra.mxu0 %v1208
    %1383 = vmatprep.subr.mxu0 %v1207
    %1384 = vmatpush2.msra.mxu0 %v1206
    %1385 = vmatprep.mubr.f32.mxu0 %v1109
    %1386 = vmatmul.mubr.f32.gmra.mxu0 %v1108
    %v1387 = vpop.f32.mrf.mxu0
    %v1388 = vadd.f32 %v1317, %v1387
    %v1389 = vpop.f32.mrf.mxu0
    %v1390 = vadd.f32 %v1319, %v1389
    %1391 = vdwg.mxu0
    %v1392 = vxor.u32 %v1388, 2147483648
    %v1393 = vxor.u32 %v1390, 2147483648
    %v1394 = vmul.f32 %v1392, 1.442695
    %v1395 = vpow.pop %v1394
    %v1396 = vmul.f32 %v1393, 1.442695
    %v1397 = vpow.pop %v1396
    %v1398 = vadd.f32 %v1395, 1.0
    %v1399 = vadd.f32 %v1397, 1.0
    %v1400 = vrcp.pop %v1398
    %v1401 = vmul.f32 1.0, %v1400
    %v1402 = vrcp.pop %v1399
    %v1403 = vmul.f32 1.0, %v1402
    %v1406 = vcombine.low %v1401, %v1403
    %v1408 = vunpack.c.l.s4 1983009808
    %v1409 = vunpack.c.0.s8 %v1408
    %v1410 = vlaneseq
    %v1411 = vshrl.u32 %v1410, 7
    %v1412 = vsub.s32 %v1409, %v1411
    %v1413 = vrot.slane %v1406, %v1412
    %1415 = vst [vmem:[%s9] sm:$0xf] %v1413
    // Predicated region
    $region46: #{decoder_forward.1} parent=1 // pred_check
      _
    $region47: #{decoder_forward.1} parent=1 // pred_check_branch
      %1417 = sbr.rel (0) target = $region49
    $region48: #{decoder_forward.1} parent=1 // pred_region
      _
    $region49: #{decoder_forward.1} parent=1 // pred_fallthru
      _
    // Predicated region
    $region50: #{decoder_forward.1} parent=1 // pred_check
      _
    $region51: #{decoder_forward.1} parent=1 // pred_check_branch
      %1419 = sbr.rel (0) target = $region53
    $region52: #{decoder_forward.1} parent=1 // pred_region
      _
    $region53: #{decoder_forward.1} parent=1 // pred_fallthru
      _
    %1420 = vsyncpa [#allocation3], 1
    %1421 = vsyncpa [#allocation5], 1

</llo_original>
